<compile_context>
chip_gen: v6e
topology: v6e:2x2x1
jax: 0.10.0
libtpu: 0.0.40
codegen_flags: <defaults>
</compile_context>

<pallas_src>
import functools
import math

import jax
import jax.numpy as jnp
from jax.experimental import pallas as pl
from jax.experimental.pallas import tpu as pltpu

LANE = 128


def _round_up(x, m):
    return (x + m - 1) // m * m


# ----------------------------------------------------------------------------
# Kernel: four back-to-back MXU matmuls with f32 accumulation, ReLU / bias in
# f32, tanh head, bf16 lane-dense output store.
# ----------------------------------------------------------------------------
def mlp_kernel(x_ref, w1_ref, b1_ref, w2_ref, b2_ref,
               w3_ref, b3_ref, wm_ref, bm_ref, o_ref):
    x = x_ref[...]                                   # already bf16 (wrapper cast)
    h = jnp.dot(x, w1_ref[...], preferred_element_type=jnp.float32) + b1_ref[...]
    h = jnp.maximum(h, 0.0).astype(jnp.bfloat16)
    h = jnp.dot(h, w2_ref[...], preferred_element_type=jnp.float32) + b2_ref[...]
    h = jnp.maximum(h, 0.0).astype(jnp.bfloat16)
    h = jnp.dot(h, w3_ref[...], preferred_element_type=jnp.float32) + b3_ref[...]
    h = jnp.maximum(h, 0.0).astype(jnp.bfloat16)
    mu = jnp.dot(h, wm_ref[...], preferred_element_type=jnp.float32) + bm_ref[...]
    o_ref[...] = jnp.tanh(mu).astype(o_ref.dtype)    # bf16 lane-dense store


# ----------------------------------------------------------------------------
# One-time parameter preparation (do NOT call per step).
#   * weights -> bf16
#   * mu head lane-padded to 128 output columns (zero cols) so the final
#     matmul and the output store are lane-dense.
# ----------------------------------------------------------------------------
def prepare_params(params):
    hidden = params["w1"].shape[1]
    n_actions = params["wm"].shape[1]
    n_out_pad = _round_up(max(n_actions, 1), LANE)

    wm_p = jnp.zeros((hidden, n_out_pad), jnp.bfloat16)
    wm_p = wm_p.at[:, :n_actions].set(params["wm"].astype(jnp.bfloat16))
    bm_p = jnp.zeros((1, n_out_pad), jnp.float32)
    bm_p = bm_p.at[:, :n_actions].set(params["bm"])

    prep = dict(
        w1=params["w1"].astype(jnp.bfloat16), b1=params["b1"],
        w2=params["w2"].astype(jnp.bfloat16), b2=params["b2"],
        w3=params["w3"].astype(jnp.bfloat16), b3=params["b3"],
        wm=wm_p, bm=bm_p,
    )
    return prep, n_actions


# ----------------------------------------------------------------------------
# Jitted forward. `prep` comes from prepare_params(); n_actions is static.
# ----------------------------------------------------------------------------
@functools.partial(jax.jit, static_argnames=("n_actions",))
def pytorch_mlp_forward(x, prep, *, n_actions):
    """x: [B, n_inputs] f32.  prep: prepared (bf16 / padded) params.
    Returns [B, n_actions] f32."""
    B, n_in = x.shape
    n_out_pad = prep["wm"].shape[1]

    # --- batch tile: up to 512 rows per grid step (VMEM headroom is ample) ---
    if B >= 512:
        tm = 512
    elif B >= 256:
        tm = 256
    elif B >= 128:
        tm = 128
    else:
        tm = _round_up(B, 8)
    b_pad = _round_up(B, tm)

    x_p = x if b_pad == B else jnp.pad(x, ((0, b_pad - B), (0, 0)))
    x_p = x_p.astype(jnp.bfloat16)                   # halve streamed x bytes

    grid_len = b_pad // tm
    # Small grids: keep everything on one TensorCore so the VMEM-resident
    # weights are DMA'd exactly once (v7x megacore would otherwise duplicate
    # the weight fetch per core).  Only shard large batches.
    semantics = ("parallel",) if grid_len > 4 else ("arbitrary",)

    def resident(a):
        # Constant block index across the batch grid axis -> fetched once,
        # stays VMEM-resident for the whole call.
        shape = a.shape
        return pl.BlockSpec(shape, lambda i: tuple(0 for _ in shape))

    out = pl.pallas_call(
        mlp_kernel,
        out_shape=jax.ShapeDtypeStruct((b_pad, n_out_pad), jnp.bfloat16),
        grid=(grid_len,),
        in_specs=[
            pl.BlockSpec((tm, n_in), lambda i: (i, 0)),   # streamed x tile
            resident(prep["w1"]), resident(prep["b1"]),
            resident(prep["w2"]), resident(prep["b2"]),
            resident(prep["w3"]), resident(prep["b3"]),
            resident(prep["wm"]), resident(prep["bm"]),
        ],
        out_specs=pl.BlockSpec((tm, n_out_pad), lambda i: (i, 0)),
        compiler_params=pltpu.CompilerParams(
            dimension_semantics=semantics,
            vmem_limit_bytes=32 << 20,
        ),
    )(x_p, prep["w1"], prep["b1"], prep["w2"], prep["b2"],
      prep["w3"], prep["b3"], prep["wm"], prep["bm"])

    return out[:B, :n_actions].astype(jnp.float32)


# ----------------------------------------------------------------------------
# Init + references
# ----------------------------------------------------------------------------
def init_params(key, n_inputs=132, n_actions=3, hidden=512):
    """Deterministic init matching PyTorch nn.Linear default (U[-1/sqrt(fan_in), +])."""
    def linear(key, fan_in, fan_out):
        kw, kb = jax.random.split(key)
        bound = 1.0 / math.sqrt(fan_in)
        w = jax.random.uniform(kw, (fan_in, fan_out), jnp.float32, -bound, bound)
        b = jax.random.uniform(kb, (1, fan_out), jnp.float32, -bound, bound)
        return w, b

    k1, k2, k3, k4 = jax.random.split(key, 4)
    w1, b1 = linear(k1, n_inputs, hidden)
    w2, b2 = linear(k2, hidden, hidden)
    w3, b3 = linear(k3, hidden, hidden)
    wm, bm = linear(k4, hidden, n_actions)
    return dict(w1=w1, b1=b1, w2=w2, b2=b2, w3=w3, b3=b3, wm=wm, bm=bm)


def reference_forward_bf16(x, p):
    """Pure-JAX reference mirroring the kernel's bf16-weight / f32-accum math."""
    def lin(h, w, b):
        return jnp.dot(h.astype(jnp.bfloat16), w.astype(jnp.bfloat16),
                       preferred_element_type=jnp.float32) + b
    h = jax.nn.relu(lin(x, p["w1"], p["b1"]))
    h = jax.nn.relu(lin(h, p["w2"], p["b2"]))
    h = jax.nn.relu(lin(h, p["w3"], p["b3"]))
    return jnp.tanh(lin(h, p["wm"], p["bm"]))


def reference_forward_f32(x, p):
    h = jax.nn.relu(x @ p["w1"] + p["b1"])
    h = jax.nn.relu(h @ p["w2"] + p["b2"])
    h = jax.nn.relu(h @ p["w3"] + p["b3"])
    return jnp.tanh(h @ p["wm"] + p["bm"])


if __name__ == "__main__":
    key = jax.random.PRNGKey(0)
    kx, kp = jax.random.split(key)

    B, N_IN, N_ACT = 8, 132, 3
    x = jax.random.normal(kx, (B, N_IN), dtype=jnp.float32)
    params = init_params(kp, n_inputs=N_IN, n_actions=N_ACT)

    # One-time prep (outside the per-step path).
    prep, n_actions = prepare_params(params)

    out = pytorch_mlp_forward(x, prep, n_actions=n_actions)
    out = jax.block_until_ready(out)

    ref_bf16 = reference_forward_bf16(x, params)
    ref_f32 = reference_forward_f32(x, params)
    assert out.shape == (B, N_ACT)
    # Tight vs the bf16-mirroring reference; loose vs the pure-f32 reference
    # (bf16 weight storage + bf16 output store trade a little precision for
    # ~2x fewer HBM bytes on this weight/store-bound kernel).
    assert jnp.allclose(out, ref_bf16, atol=2e-2, rtol=2e-2), "mismatch vs bf16 JAX reference"
    assert jnp.allclose(out, ref_f32, atol=5e-2, rtol=5e-2), "mismatch vs f32 JAX reference"

    print("KERNEL_OK")
</pallas_src>

<mosaic_0001>
module attributes {stable_mosaic.version = 11 : i64} {
  func.func @mlp_kernel(%arg0: i32, %arg1: memref<8x132xbf16, #tpu.memory_space<vmem>>, %arg2: memref<132x512xbf16, #tpu.memory_space<vmem>>, %arg3: memref<1x512xf32, #tpu.memory_space<vmem>>, %arg4: memref<512x512xbf16, #tpu.memory_space<vmem>>, %arg5: memref<1x512xf32, #tpu.memory_space<vmem>>, %arg6: memref<512x512xbf16, #tpu.memory_space<vmem>>, %arg7: memref<1x512xf32, #tpu.memory_space<vmem>>, %arg8: memref<512x128xbf16, #tpu.memory_space<vmem>>, %arg9: memref<1x128xf32, #tpu.memory_space<vmem>>, %arg10: memref<8x128xbf16, #tpu.memory_space<vmem>>) attributes {dimension_semantics = [#tpu.dimension_semantics<arbitrary>], iteration_bounds = array<i64: 1>, scalar_prefetch = 0 : i64, scratch_operands = 0 : i64, tpu.core_type = #tpu.core_type<tc>, window_params = [{transform_indices = @transform_0, window_bounds = array<i64: 8, 132>}, {pipeline_mode = #tpu.pipeline_mode<synchronous>, transform_indices = @transform_1, window_bounds = array<i64: 132, 512>}, {pipeline_mode = #tpu.pipeline_mode<synchronous>, transform_indices = @transform_2, window_bounds = array<i64: 1, 512>}, {pipeline_mode = #tpu.pipeline_mode<synchronous>, transform_indices = @transform_3, window_bounds = array<i64: 512, 512>}, {pipeline_mode = #tpu.pipeline_mode<synchronous>, transform_indices = @transform_4, window_bounds = array<i64: 1, 512>}, {pipeline_mode = #tpu.pipeline_mode<synchronous>, transform_indices = @transform_5, window_bounds = array<i64: 512, 512>}, {pipeline_mode = #tpu.pipeline_mode<synchronous>, transform_indices = @transform_6, window_bounds = array<i64: 1, 512>}, {pipeline_mode = #tpu.pipeline_mode<synchronous>, transform_indices = @transform_7, window_bounds = array<i64: 512, 128>}, {pipeline_mode = #tpu.pipeline_mode<synchronous>, transform_indices = @transform_8, window_bounds = array<i64: 1, 128>}, {transform_indices = @transform_9, window_bounds = array<i64: 8, 128>}]} {
    %c0 = arith.constant 0 : index
    %c0_0 = arith.constant 0 : index
    %0 = vector.load %arg1[%c0, %c0_0] : memref<8x132xbf16, #tpu.memory_space<vmem>>, vector<8x132xbf16>
    %c0_1 = arith.constant 0 : index
    %c0_2 = arith.constant 0 : index
    %1 = vector.load %arg2[%c0_1, %c0_2] : memref<132x512xbf16, #tpu.memory_space<vmem>>, vector<132x512xbf16>
    %cst = arith.constant dense<0.000000e+00> : vector<8x512xf32>
    %2 = tpu.matmul %0, %1, %cst {dimension_numbers = #tpu.dot_dimension_numbers<[1], [0], [0], [1], [0, 0, 1, 1], [], []>} : vector<8x132xbf16>, vector<132x512xbf16>, vector<8x512xf32> -> vector<8x512xf32>
    %c0_3 = arith.constant 0 : index
    %c0_4 = arith.constant 0 : index
    %3 = vector.load %arg3[%c0_3, %c0_4] : memref<1x512xf32, #tpu.memory_space<vmem>>, vector<1x512xf32>
    %4 = vector.broadcast %3 : vector<1x512xf32> to vector<8x512xf32>
    %5 = arith.addf %2, %4 : vector<8x512xf32>
    %cst_5 = arith.constant 0.000000e+00 : f32
    %6 = vector.broadcast %cst_5 : f32 to vector<8x512xf32>
    %7 = arith.maximumf %5, %6 : vector<8x512xf32>
    %8 = arith.truncf %7 : vector<8x512xf32> to vector<8x512xbf16>
    %c0_6 = arith.constant 0 : index
    %c0_7 = arith.constant 0 : index
    %9 = vector.load %arg4[%c0_6, %c0_7] : memref<512x512xbf16, #tpu.memory_space<vmem>>, vector<512x512xbf16>
    %cst_8 = arith.constant dense<0.000000e+00> : vector<8x512xf32>
    %10 = tpu.matmul %8, %9, %cst_8 {dimension_numbers = #tpu.dot_dimension_numbers<[1], [0], [0], [1], [0, 0, 1, 1], [], []>} : vector<8x512xbf16>, vector<512x512xbf16>, vector<8x512xf32> -> vector<8x512xf32>
    %c0_9 = arith.constant 0 : index
    %c0_10 = arith.constant 0 : index
    %11 = vector.load %arg5[%c0_9, %c0_10] : memref<1x512xf32, #tpu.memory_space<vmem>>, vector<1x512xf32>
    %12 = vector.broadcast %11 : vector<1x512xf32> to vector<8x512xf32>
    %13 = arith.addf %10, %12 : vector<8x512xf32>
    %cst_11 = arith.constant 0.000000e+00 : f32
    %14 = vector.broadcast %cst_11 : f32 to vector<8x512xf32>
    %15 = arith.maximumf %13, %14 : vector<8x512xf32>
    %16 = arith.truncf %15 : vector<8x512xf32> to vector<8x512xbf16>
    %c0_12 = arith.constant 0 : index
    %c0_13 = arith.constant 0 : index
    %17 = vector.load %arg6[%c0_12, %c0_13] : memref<512x512xbf16, #tpu.memory_space<vmem>>, vector<512x512xbf16>
    %cst_14 = arith.constant dense<0.000000e+00> : vector<8x512xf32>
    %18 = tpu.matmul %16, %17, %cst_14 {dimension_numbers = #tpu.dot_dimension_numbers<[1], [0], [0], [1], [0, 0, 1, 1], [], []>} : vector<8x512xbf16>, vector<512x512xbf16>, vector<8x512xf32> -> vector<8x512xf32>
    %c0_15 = arith.constant 0 : index
    %c0_16 = arith.constant 0 : index
    %19 = vector.load %arg7[%c0_15, %c0_16] : memref<1x512xf32, #tpu.memory_space<vmem>>, vector<1x512xf32>
    %20 = vector.broadcast %19 : vector<1x512xf32> to vector<8x512xf32>
    %21 = arith.addf %18, %20 : vector<8x512xf32>
    %cst_17 = arith.constant 0.000000e+00 : f32
    %22 = vector.broadcast %cst_17 : f32 to vector<8x512xf32>
    %23 = arith.maximumf %21, %22 : vector<8x512xf32>
    %24 = arith.truncf %23 : vector<8x512xf32> to vector<8x512xbf16>
    %c0_18 = arith.constant 0 : index
    %c0_19 = arith.constant 0 : index
    %25 = vector.load %arg8[%c0_18, %c0_19] : memref<512x128xbf16, #tpu.memory_space<vmem>>, vector<512x128xbf16>
    %cst_20 = arith.constant dense<0.000000e+00> : vector<8x128xf32>
    %26 = tpu.matmul %24, %25, %cst_20 {dimension_numbers = #tpu.dot_dimension_numbers<[1], [0], [0], [1], [0, 0, 1, 1], [], []>} : vector<8x512xbf16>, vector<512x128xbf16>, vector<8x128xf32> -> vector<8x128xf32>
    %c0_21 = arith.constant 0 : index
    %c0_22 = arith.constant 0 : index
    %27 = vector.load %arg9[%c0_21, %c0_22] : memref<1x128xf32, #tpu.memory_space<vmem>>, vector<1x128xf32>
    %28 = vector.broadcast %27 : vector<1x128xf32> to vector<8x128xf32>
    %29 = arith.addf %26, %28 : vector<8x128xf32>
    %30 = math.tanh %29 : vector<8x128xf32>
    %31 = arith.truncf %30 : vector<8x128xf32> to vector<8x128xbf16>
    %c0_23 = arith.constant 0 : index
    %c0_24 = arith.constant 0 : index
    %32 = vector.load %arg10[%c0_23, %c0_24] : memref<8x128xbf16, #tpu.memory_space<vmem>>, vector<8x128xbf16>
    tpu.vector_store %arg10[%c0_23, %c0_24], %31 {strides = array<i32>} : memref<8x128xbf16, #tpu.memory_space<vmem>>, vector<8x128xbf16>,
    return
  }
  func.func @transform_0(%arg0: i32) -> (i32, i32) {
    %c0_i32 = arith.constant 0 : i32
    %c0_i32_0 = arith.constant 0 : i32
    return %arg0, %c0_i32 : i32, i32
  }
  func.func @transform_1(%arg0: i32) -> (i32, i32) {
    %c0_i32 = arith.constant 0 : i32
    %c0_i32_0 = arith.constant 0 : i32
    %c0_i32_1 = arith.constant 0 : i32
    return %c0_i32, %c0_i32_0 : i32, i32
  }
  func.func @transform_2(%arg0: i32) -> (i32, i32) {
    %c0_i32 = arith.constant 0 : i32
    %c0_i32_0 = arith.constant 0 : i32
    %c0_i32_1 = arith.constant 0 : i32
    return %c0_i32, %c0_i32_0 : i32, i32
  }
  func.func @transform_3(%arg0: i32) -> (i32, i32) {
    %c0_i32 = arith.constant 0 : i32
    %c0_i32_0 = arith.constant 0 : i32
    %c0_i32_1 = arith.constant 0 : i32
    return %c0_i32, %c0_i32_0 : i32, i32
  }
  func.func @transform_4(%arg0: i32) -> (i32, i32) {
    %c0_i32 = arith.constant 0 : i32
    %c0_i32_0 = arith.constant 0 : i32
    %c0_i32_1 = arith.constant 0 : i32
    return %c0_i32, %c0_i32_0 : i32, i32
  }
  func.func @transform_5(%arg0: i32) -> (i32, i32) {
    %c0_i32 = arith.constant 0 : i32
    %c0_i32_0 = arith.constant 0 : i32
    %c0_i32_1 = arith.constant 0 : i32
    return %c0_i32, %c0_i32_0 : i32, i32
  }
  func.func @transform_6(%arg0: i32) -> (i32, i32) {
    %c0_i32 = arith.constant 0 : i32
    %c0_i32_0 = arith.constant 0 : i32
    %c0_i32_1 = arith.constant 0 : i32
    return %c0_i32, %c0_i32_0 : i32, i32
  }
  func.func @transform_7(%arg0: i32) -> (i32, i32) {
    %c0_i32 = arith.constant 0 : i32
    %c0_i32_0 = arith.constant 0 : i32
    %c0_i32_1 = arith.constant 0 : i32
    return %c0_i32, %c0_i32_0 : i32, i32
  }
  func.func @transform_8(%arg0: i32) -> (i32, i32) {
    %c0_i32 = arith.constant 0 : i32
    %c0_i32_0 = arith.constant 0 : i32
    %c0_i32_1 = arith.constant 0 : i32
    return %c0_i32, %c0_i32_0 : i32, i32
  }
  func.func @transform_9(%arg0: i32) -> (i32, i32) {
    %c0_i32 = arith.constant 0 : i32
    %c0_i32_0 = arith.constant 0 : i32
    return %arg0, %c0_i32 : i32, i32
  }
}

</mosaic_0001>

<llo_original>
// kernel: pytorch_mlp_forward.1
$region0: #{pytorch_mlp_forward.1}
  #allocation0 [shape = 'u32[]', space=smem, size = 0x4, offset = 0x4, fixed_abs, tag = 'smem constant byte address 0x4 - core index']
  #allocation1 [shape = 'u32[144,128]{1,0:T(1,128)}', space=vmem, size = 0x12000, scoped, tag = 'internal scratch']
  %s0 = inlined_call_operand.vmem [shape: bf16[8,132], index: 0, kind: input, shape index: {}]
  %s1 = inlined_call_operand.hbm [shape: bf16[132,512], index: 1, kind: input, shape index: {}]
  %s2 = inlined_call_operand.vmem [shape: f32[1,512], index: 2, kind: input, shape index: {}]
  %s3 = inlined_call_operand.hbm [shape: bf16[512,512], index: 3, kind: input, shape index: {}]
  %s4 = inlined_call_operand.vmem [shape: f32[1,512], index: 4, kind: input, shape index: {}]
  %s5 = inlined_call_operand.hbm [shape: bf16[512,512], index: 5, kind: input, shape index: {}]
  %s6 = inlined_call_operand.vmem [shape: f32[1,512], index: 6, kind: input, shape index: {}]
  %s7 = inlined_call_operand.hbm [shape: bf16[512,128], index: 7, kind: input, shape index: {}]
  %s8 = inlined_call_operand.vmem [shape: f32[1,128], index: 8, kind: input, shape index: {}]
  %s9 = inlined_call_operand.vmem [shape: bf16[8,128], index: 9, kind: output, shape index: {}]
  %s10 = sld [smem:[#allocation0]]
  $region62: #{pytorch_mlp_forward.1} parent=0
    _
  %s12 = ssub.s32 1, %s10
  %s13 = scalar_select 0, %s12, %s10
  $region1: #{pytorch_mlp_forward.1} parent=0
    #allocation2 [shape = 'u8[139264]{0}', space=vmem, size = 0x22000, scoped, tag = 'input window, operand 1, single buffered']
    #allocation3 [shape = 's32[1]{0}', space=sflag, size = 0x4, scoped, tag = 'scoped memory for pytorch_mlp_forward.1']
    #allocation4 [shape = 'u8[524288]{0}', space=vmem, size = 0x80000, scoped, tag = 'input window, operand 3, single buffered']
    #allocation5 [shape = 's32[1]{0}', space=sflag, size = 0x4, scoped, tag = 'scoped memory for pytorch_mlp_forward.1']
    #allocation6 [shape = 'u8[524288]{0}', space=vmem, size = 0x80000, scoped, tag = 'input window, operand 5, single buffered']
    #allocation7 [shape = 'u8[131072]{0}', space=vmem, size = 0x20000, scoped, tag = 'input window, operand 7, single buffered']
    #allocation8 [shape = 's32[1]{0}', space=sflag, size = 0x4, scoped, tag = 'scoped memory for pytorch_mlp_forward.1']
    %14 = vsyncpa [#allocation3], 0
    %15 = vsyncpa [#allocation5], 0
    %16 = vsyncpa [#allocation8], 0
    // Predicated region
    $region2: #{pytorch_mlp_forward.1} parent=1 // pred_check
      _
    $region3: #{pytorch_mlp_forward.1} parent=1 // pred_check_branch
      %18 = sbr.rel (0) target = $region5
    $region4: #{pytorch_mlp_forward.1} parent=1 // pred_region
      _
    $region5: #{pytorch_mlp_forward.1} parent=1 // pred_fallthru
      _
    // Predicated region
    $region6: #{pytorch_mlp_forward.1} parent=1 // pred_check
      _
    $region7: #{pytorch_mlp_forward.1} parent=1 // pred_check_branch
      %20 = sbr.rel (0) target = $region9
    $region8: #{pytorch_mlp_forward.1} parent=1 // pred_region
      %s22 = ssub.s32 4352, 4352
      %23 = vsyncadd [#allocation3], %s22
      %s24 = sshll.u32 [#allocation2], 4
      %s25 = int_to_ptr.vmem [resolvable:$true] %s24
      %30 = dma.hbm_to_vmem [thread:$0]  %s1, 4352, %s25, [#allocation3], 256, 256, 16
    $region9: #{pytorch_mlp_forward.1} parent=1 // pred_fallthru
      _
    // Predicated region
    $region10: #{pytorch_mlp_forward.1} parent=1 // pred_check
      _
    $region11: #{pytorch_mlp_forward.1} parent=1 // pred_check_branch
      %32 = sbr.rel (0) target = $region13
    $region12: #{pytorch_mlp_forward.1} parent=1 // pred_region
      _
    $region13: #{pytorch_mlp_forward.1} parent=1 // pred_fallthru
      _
    // Predicated region
    $region14: #{pytorch_mlp_forward.1} parent=1 // pred_check
      _
    $region15: #{pytorch_mlp_forward.1} parent=1 // pred_check_branch
      %34 = sbr.rel (0) target = $region17
    $region16: #{pytorch_mlp_forward.1} parent=1 // pred_region
      %s36 = ssub.s32 16384, 16384
      %37 = vsyncadd [#allocation5], %s36
      %s38 = sshll.u32 [#allocation4], 4
      %s39 = int_to_ptr.vmem [resolvable:$true] %s38
      %44 = dma.hbm_to_vmem [thread:$0]  %s3, 16384, %s39, [#allocation5], 256, 256, 16
    $region17: #{pytorch_mlp_forward.1} parent=1 // pred_fallthru
      _
    // Predicated region
    $region18: #{pytorch_mlp_forward.1} parent=1 // pred_check
      _
    $region19: #{pytorch_mlp_forward.1} parent=1 // pred_check_branch
      %46 = sbr.rel (0) target = $region21
    $region20: #{pytorch_mlp_forward.1} parent=1 // pred_region
      _
    $region21: #{pytorch_mlp_forward.1} parent=1 // pred_fallthru
      _
    // Predicated region
    $region22: #{pytorch_mlp_forward.1} parent=1 // pred_check
      _
    $region23: #{pytorch_mlp_forward.1} parent=1 // pred_check_branch
      %48 = sbr.rel (0) target = $region25
    $region24: #{pytorch_mlp_forward.1} parent=1 // pred_region
      %s50 = ssub.s32 16384, 16384
      %51 = vsyncadd [#allocation5], %s50
      %s52 = sshll.u32 [#allocation6], 4
      %s53 = int_to_ptr.vmem [resolvable:$true] %s52
      %58 = dma.hbm_to_vmem [thread:$0]  %s5, 16384, %s53, [#allocation5], 256, 256, 16
    $region25: #{pytorch_mlp_forward.1} parent=1 // pred_fallthru
      _
    // Predicated region
    $region26: #{pytorch_mlp_forward.1} parent=1 // pred_check
      _
    $region27: #{pytorch_mlp_forward.1} parent=1 // pred_check_branch
      %60 = sbr.rel (0) target = $region29
    $region28: #{pytorch_mlp_forward.1} parent=1 // pred_region
      _
    $region29: #{pytorch_mlp_forward.1} parent=1 // pred_fallthru
      _
    // Predicated region
    $region30: #{pytorch_mlp_forward.1} parent=1 // pred_check
      _
    $region31: #{pytorch_mlp_forward.1} parent=1 // pred_check_branch
      %62 = sbr.rel (0) target = $region33
    $region32: #{pytorch_mlp_forward.1} parent=1 // pred_region
      %s64 = ssub.s32 4096, 4096
      %65 = vsyncadd [#allocation8], %s64
      %s66 = sshll.u32 [#allocation7], 4
      %s67 = int_to_ptr.vmem [resolvable:$true] %s66
      %72 = dma.hbm_to_vmem [thread:$0]  %s7, 4096, %s67, [#allocation8], 64, 64, 4
    $region33: #{pytorch_mlp_forward.1} parent=1 // pred_fallthru
      _
    // Predicated region
    $region34: #{pytorch_mlp_forward.1} parent=1 // pred_check
      _
    $region35: #{pytorch_mlp_forward.1} parent=1 // pred_check_branch
      %74 = sbr.rel (0) target = $region37
    $region36: #{pytorch_mlp_forward.1} parent=1 // pred_region
      _
    $region37: #{pytorch_mlp_forward.1} parent=1 // pred_fallthru
      _
    // Predicated region
    $region38: #{pytorch_mlp_forward.1} parent=1 // pred_check
      _
    $region39: #{pytorch_mlp_forward.1} parent=1 // pred_check_branch
      %76 = sbr.rel (0) target = $region41
    $region40: #{pytorch_mlp_forward.1} parent=1 // pred_region
      %77 = dma.done [#allocation3], 4352
    $region41: #{pytorch_mlp_forward.1} parent=1 // pred_fallthru
      _
    // Predicated region
    $region42: #{pytorch_mlp_forward.1} parent=1 // pred_check
      _
    $region43: #{pytorch_mlp_forward.1} parent=1 // pred_check_branch
      %79 = sbr.rel (0) target = $region45
    $region44: #{pytorch_mlp_forward.1} parent=1 // pred_region
      %80 = dma.done [#allocation5], 16384
    $region45: #{pytorch_mlp_forward.1} parent=1 // pred_fallthru
      _
    // Predicated region
    $region46: #{pytorch_mlp_forward.1} parent=1 // pred_check
      _
    $region47: #{pytorch_mlp_forward.1} parent=1 // pred_check_branch
      %82 = sbr.rel (0) target = $region49
    $region48: #{pytorch_mlp_forward.1} parent=1 // pred_region
      %83 = dma.done [#allocation5], 16384
    $region49: #{pytorch_mlp_forward.1} parent=1 // pred_fallthru
      _
    // Predicated region
    $region50: #{pytorch_mlp_forward.1} parent=1 // pred_check
      _
    $region51: #{pytorch_mlp_forward.1} parent=1 // pred_check_branch
      %85 = sbr.rel (0) target = $region53
    $region52: #{pytorch_mlp_forward.1} parent=1 // pred_region
      %86 = dma.done [#allocation8], 4096
    $region53: #{pytorch_mlp_forward.1} parent=1 // pred_fallthru
      _
    %v88 = vld [vmem:[%s0] sm:$0xff]
    %v89 = vld [vmem:[#allocation2] sm:$0xff]
    %v90 = vld [vmem:[#allocation2 + $0x8] sm:$0xff]
    %v91 = vld [vmem:[#allocation2 + $0x10] sm:$0xff]
    %v92 = vld [vmem:[#allocation2 + $0x18] sm:$0xff]
    %v93 = vld [vmem:[#allocation2 + $0x20] sm:$0xff]
    %v94 = vld [vmem:[#allocation2 + $0x28] sm:$0xff]
    %v95 = vld [vmem:[#allocation2 + $0x30] sm:$0xff]
    %v96 = vld [vmem:[#allocation2 + $0x38] sm:$0xff]
    %v97 = vld [vmem:[#allocation2 + $0x40] sm:$0xff]
    %v98 = vld [vmem:[#allocation2 + $0x48] sm:$0xff]
    %v99 = vld [vmem:[#allocation2 + $0x50] sm:$0xff]
    %v100 = vld [vmem:[#allocation2 + $0x58] sm:$0xff]
    %v101 = vld [vmem:[#allocation2 + $0x60] sm:$0xff]
    %v102 = vld [vmem:[#allocation2 + $0x68] sm:$0xff]
    %v103 = vld [vmem:[#allocation2 + $0x70] sm:$0xff]
    %v104 = vld [vmem:[#allocation2 + $0x78] sm:$0xff]
    %v105 = vld [vmem:[#allocation2 + $0x80] sm:$0xff]
    %v106 = vld [vmem:[#allocation2 + $0x88] sm:$0xff]
    %v107 = vld [vmem:[#allocation2 + $0x90] sm:$0xff]
    %v108 = vld [vmem:[#allocation2 + $0x98] sm:$0xff]
    %v109 = vld [vmem:[#allocation2 + $0xa0] sm:$0xff]
    %v110 = vld [vmem:[#allocation2 + $0xa8] sm:$0xff]
    %v111 = vld [vmem:[#allocation2 + $0xb0] sm:$0xff]
    %v112 = vld [vmem:[#allocation2 + $0xb8] sm:$0xff]
    %v113 = vld [vmem:[#allocation2 + $0xc0] sm:$0xff]
    %v114 = vld [vmem:[#allocation2 + $0xc8] sm:$0xff]
    %v115 = vld [vmem:[#allocation2 + $0xd0] sm:$0xff]
    %v116 = vld [vmem:[#allocation2 + $0xd8] sm:$0xff]
    %v117 = vld [vmem:[#allocation2 + $0xe0] sm:$0xff]
    %v118 = vld [vmem:[#allocation2 + $0xe8] sm:$0xff]
    %v119 = vld [vmem:[#allocation2 + $0xf0] sm:$0xff]
    %v120 = vld [vmem:[#allocation2 + $0xf8] sm:$0xff]
    %v121 = vld [vmem:[#allocation2 + $0x100] sm:$0x33]
    %v122 = vld [vmem:[#allocation2 + $0x108] sm:$0x33]
    %v123 = vld [vmem:[%s2] sm:$0xf]
    %v125 = vlaneseq
    %v126 = vshrl.u32 %v125, 7
    %v127 = vsub.s32 0, %v126
    %v128 = vrot.slane %v123, %v127
    %v129 = vlaneseq
    %v130 = vshrl.u32 %v129, 7
    %v131 = vsub.s32 1, %v130
    %v132 = vrot.slane %v123, %v131
    %v133 = vlaneseq
    %v134 = vshrl.u32 %v133, 7
    %v135 = vsub.s32 2, %v134
    %v136 = vrot.slane %v123, %v135
    %v137 = vlaneseq
    %v138 = vshrl.u32 %v137, 7
    %v139 = vsub.s32 3, %v138
    %v140 = vrot.slane %v123, %v139
    %v146 = vunpack.c.l.b16 %v88
    %v147 = vunpack.c.h.b16 %v88
    %v148 = vpack.c.b16 %v146, %v146
    %v149 = vpack.c.b16 %v147, %v147
    %v185 = vunpack.c.l.b16 %v89
    %v186 = vunpack.c.h.b16 %v89
    %v187 = vunpack.c.l.b16 %v90
    %v188 = vunpack.c.h.b16 %v90
    %v189 = vunpack.c.l.b16 %v91
    %v190 = vunpack.c.h.b16 %v91
    %v191 = vunpack.c.l.b16 %v92
    %v192 = vunpack.c.h.b16 %v92
    %v193 = vunpack.c.l.b16 %v93
    %v194 = vunpack.c.h.b16 %v93
    %v195 = vunpack.c.l.b16 %v94
    %v196 = vunpack.c.h.b16 %v94
    %v197 = vunpack.c.l.b16 %v95
    %v198 = vunpack.c.h.b16 %v95
    %v199 = vunpack.c.l.b16 %v96
    %v200 = vunpack.c.h.b16 %v96
    %v201 = vunpack.c.l.b16 %v97
    %v202 = vunpack.c.h.b16 %v97
    %v203 = vunpack.c.l.b16 %v98
    %v204 = vunpack.c.h.b16 %v98
    %v205 = vunpack.c.l.b16 %v99
    %v206 = vunpack.c.h.b16 %v99
    %v207 = vunpack.c.l.b16 %v100
    %v208 = vunpack.c.h.b16 %v100
    %v209 = vunpack.c.l.b16 %v101
    %v210 = vunpack.c.h.b16 %v101
    %v211 = vunpack.c.l.b16 %v102
    %v212 = vunpack.c.h.b16 %v102
    %v213 = vunpack.c.l.b16 %v103
    %v214 = vunpack.c.h.b16 %v103
    %v215 = vunpack.c.l.b16 %v104
    %v216 = vunpack.c.h.b16 %v104
    %v217 = vunpack.c.l.b16 %v105
    %v218 = vunpack.c.h.b16 %v105
    %v219 = vunpack.c.l.b16 %v106
    %v220 = vunpack.c.h.b16 %v106
    %v221 = vunpack.c.l.b16 %v107
    %v222 = vunpack.c.h.b16 %v107
    %v223 = vunpack.c.l.b16 %v108
    %v224 = vunpack.c.h.b16 %v108
    %v225 = vunpack.c.l.b16 %v109
    %v226 = vunpack.c.h.b16 %v109
    %v227 = vunpack.c.l.b16 %v110
    %v228 = vunpack.c.h.b16 %v110
    %v229 = vunpack.c.l.b16 %v111
    %v230 = vunpack.c.h.b16 %v111
    %v231 = vunpack.c.l.b16 %v112
    %v232 = vunpack.c.h.b16 %v112
    %v233 = vunpack.c.l.b16 %v113
    %v234 = vunpack.c.h.b16 %v113
    %v235 = vunpack.c.l.b16 %v114
    %v236 = vunpack.c.h.b16 %v114
    %v237 = vunpack.c.l.b16 %v115
    %v238 = vunpack.c.h.b16 %v115
    %v239 = vunpack.c.l.b16 %v116
    %v240 = vunpack.c.h.b16 %v116
    %v241 = vunpack.c.l.b16 %v117
    %v242 = vunpack.c.h.b16 %v117
    %v243 = vunpack.c.l.b16 %v118
    %v244 = vunpack.c.h.b16 %v118
    %v245 = vunpack.c.l.b16 %v119
    %v246 = vunpack.c.h.b16 %v119
    %v247 = vunpack.c.l.b16 %v120
    %v248 = vunpack.c.h.b16 %v120
    %v249 = vunpack.c.l.b16 %v121
    %v250 = vunpack.c.h.b16 %v121
    %v251 = vunpack.c.l.b16 %v122
    %v252 = vunpack.c.h.b16 %v122
    %v253 = vpack.c.b16 %v189, %v185
    %v254 = vpack.c.b16 %v190, %v186
    %v255 = vpack.c.b16 %v191, %v187
    %v256 = vpack.c.b16 %v192, %v188
    %v257 = vpack.c.b16 %v197, %v193
    %v258 = vpack.c.b16 %v198, %v194
    %v259 = vpack.c.b16 %v199, %v195
    %v260 = vpack.c.b16 %v200, %v196
    %v261 = vpack.c.b16 %v205, %v201
    %v262 = vpack.c.b16 %v206, %v202
    %v263 = vpack.c.b16 %v207, %v203
    %v264 = vpack.c.b16 %v208, %v204
    %v265 = vpack.c.b16 %v213, %v209
    %v266 = vpack.c.b16 %v214, %v210
    %v267 = vpack.c.b16 %v215, %v211
    %v268 = vpack.c.b16 %v216, %v212
    %v269 = vpack.c.b16 %v221, %v217
    %v270 = vpack.c.b16 %v222, %v218
    %v271 = vpack.c.b16 %v223, %v219
    %v272 = vpack.c.b16 %v224, %v220
    %v273 = vpack.c.b16 %v229, %v225
    %v274 = vpack.c.b16 %v230, %v226
    %v275 = vpack.c.b16 %v231, %v227
    %v276 = vpack.c.b16 %v232, %v228
    %v277 = vpack.c.b16 %v237, %v233
    %v278 = vpack.c.b16 %v238, %v234
    %v279 = vpack.c.b16 %v239, %v235
    %v280 = vpack.c.b16 %v240, %v236
    %v281 = vpack.c.b16 %v245, %v241
    %v282 = vpack.c.b16 %v246, %v242
    %v283 = vpack.c.b16 %v247, %v243
    %v284 = vpack.c.b16 %v248, %v244
    %v285 = vpack.c.b16 %v249, %v249
    %v286 = vpack.c.b16 %v250, %v250
    %v287 = vpack.c.b16 %v251, %v251
    %v288 = vpack.c.b16 %v252, %v252
    %vm321 = vcmask 31744
    %v323 = vsel %vm321, %v149, 0
    %vm325 = vcmask 1041408
    %v327 = vsel %vm325, %v285, 0
    %v330 = vsel %vm325, %v286, 0
    %v333 = vsel %vm325, %v287, 0
    %v336 = vsel %vm325, %v288, 0
    %338 = vmatprep.subr.bf16.mxu0 %v282
    %339 = vmatpush1.bf16.msra.mxu0 %v281
    %340 = vmatprep.subr.bf16.mxu0 %v278
    %341 = vmatpush1.bf16.msra.mxu0 %v277
    %342 = vmatprep.subr.bf16.mxu0 %v274
    %343 = vmatpush1.bf16.msra.mxu0 %v273
    %344 = vmatprep.subr.bf16.mxu0 %v270
    %345 = vmatpush1.bf16.msra.mxu0 %v269
    %346 = vmatprep.subr.bf16.mxu0 %v266
    %347 = vmatpush1.bf16.msra.mxu0 %v265
    %348 = vmatprep.subr.bf16.mxu0 %v262
    %349 = vmatpush1.bf16.msra.mxu0 %v261
    %350 = vmatprep.subr.bf16.mxu0 %v258
    %351 = vmatpush1.bf16.msra.mxu0 %v257
    %352 = vmatprep.subr.bf16.mxu0 %v254
    %353 = vmatpush1.bf16.msra.mxu0 %v253
    %354 = vmatprep.subr.bf16.mxu0 0
    %355 = vmatpush2.bf16.msra.mxu0 0
    %356 = vmatprep.subr.bf16.mxu0 0
    %357 = vmatpush2.bf16.msra.mxu0 0
    %358 = vmatprep.subr.bf16.mxu0 0
    %359 = vmatpush2.bf16.msra.mxu0 0
    %360 = vmatprep.subr.bf16.mxu0 0
    %361 = vmatpush2.bf16.msra.mxu0 0
    %362 = vmatprep.subr.bf16.mxu0 0
    %363 = vmatpush2.bf16.msra.mxu0 0
    %364 = vmatprep.subr.bf16.mxu0 0
    %365 = vmatpush2.bf16.msra.mxu0 0
    %366 = vmatprep.subr.bf16.mxu0 0
    %367 = vmatpush2.bf16.msra.mxu0 0
    %368 = vmatprep.subr.bf16.mxu0 %v330
    %369 = vmatpush2.bf16.msra.mxu0 %v327
    %370 = vmatprep.mubr.bf16.mxu0 %v323
    %371 = vmatmul.mubr.bf16.gmra.mxu0 %v148
    %v372 = vpop.f32.mrf.mxu0
    %v373 = vadd.f32 %v128, %v372
    %v374 = vpop.f32.mrf.mxu0
    %v375 = vadd.f32 %v132, %v374
    %v376 = vpop.f32.mrf.mxu0
    %v377 = vpop.f32.mrf.mxu0
    %378 = vdwg.mxu0
    %379 = vmatprep.subr.bf16.mxu0 %v284
    %380 = vmatpush1.bf16.msra.mxu0 %v283
    %381 = vmatprep.subr.bf16.mxu0 %v280
    %382 = vmatpush1.bf16.msra.mxu0 %v279
    %383 = vmatprep.subr.bf16.mxu0 %v276
    %384 = vmatpush1.bf16.msra.mxu0 %v275
    %385 = vmatprep.subr.bf16.mxu0 %v272
    %386 = vmatpush1.bf16.msra.mxu0 %v271
    %387 = vmatprep.subr.bf16.mxu0 %v268
    %388 = vmatpush1.bf16.msra.mxu0 %v267
    %389 = vmatprep.subr.bf16.mxu0 %v264
    %390 = vmatpush1.bf16.msra.mxu0 %v263
    %391 = vmatprep.subr.bf16.mxu0 %v260
    %392 = vmatpush1.bf16.msra.mxu0 %v259
    %393 = vmatprep.subr.bf16.mxu0 %v256
    %394 = vmatpush1.bf16.msra.mxu0 %v255
    %395 = vmatprep.subr.bf16.mxu0 0
    %396 = vmatpush2.bf16.msra.mxu0 0
    %397 = vmatprep.subr.bf16.mxu0 0
    %398 = vmatpush2.bf16.msra.mxu0 0
    %399 = vmatprep.subr.bf16.mxu0 0
    %400 = vmatpush2.bf16.msra.mxu0 0
    %401 = vmatprep.subr.bf16.mxu0 0
    %402 = vmatpush2.bf16.msra.mxu0 0
    %403 = vmatprep.subr.bf16.mxu0 0
    %404 = vmatpush2.bf16.msra.mxu0 0
    %405 = vmatprep.subr.bf16.mxu0 0
    %406 = vmatpush2.bf16.msra.mxu0 0
    %407 = vmatprep.subr.bf16.mxu0 0
    %408 = vmatpush2.bf16.msra.mxu0 0
    %409 = vmatprep.subr.bf16.mxu0 %v336
    %410 = vmatpush2.bf16.msra.mxu0 %v333
    %411 = vmatprep.mubr.bf16.mxu0 %v323
    %412 = vmatmul.mubr.bf16.gmra.mxu0 %v148
    %v413 = vpop.f32.mrf.mxu0
    %v414 = vadd.f32 %v136, %v413
    %v415 = vpop.f32.mrf.mxu0
    %v416 = vadd.f32 %v140, %v415
    %v417 = vpop.f32.mrf.mxu0
    %v418 = vpop.f32.mrf.mxu0
    %419 = vdwg.mxu0
    %v420 = vmax.f32 %v373, 0.0
    %v421 = vmax.f32 %v375, 0.0
    %v422 = vmax.f32 %v414, 0.0
    %v423 = vmax.f32 %v416, 0.0
    %v424 = vpack.c.bf16 %v420, %v420
    %v425 = vpack.c.bf16 %v421, %v421
    %v426 = vpack.c.bf16 %v422, %v422
    %v427 = vpack.c.bf16 %v423, %v423
    %v428 = vld [vmem:[#allocation4] sm:$0xff]
    %v429 = vld [vmem:[#allocation4 + $0x8] sm:$0xff]
    %v430 = vld [vmem:[#allocation4 + $0x10] sm:$0xff]
    %v431 = vld [vmem:[#allocation4 + $0x18] sm:$0xff]
    %v432 = vld [vmem:[#allocation4 + $0x20] sm:$0xff]
    %v433 = vld [vmem:[#allocation4 + $0x28] sm:$0xff]
    %v434 = vld [vmem:[#allocation4 + $0x30] sm:$0xff]
    %v435 = vld [vmem:[#allocation4 + $0x38] sm:$0xff]
    %v436 = vld [vmem:[#allocation4 + $0x40] sm:$0xff]
    %v437 = vld [vmem:[#allocation4 + $0x48] sm:$0xff]
    %v438 = vld [vmem:[#allocation4 + $0x50] sm:$0xff]
    %v439 = vld [vmem:[#allocation4 + $0x58] sm:$0xff]
    %v440 = vld [vmem:[#allocation4 + $0x60] sm:$0xff]
    %v441 = vld [vmem:[#allocation4 + $0x68] sm:$0xff]
    %v442 = vld [vmem:[#allocation4 + $0x70] sm:$0xff]
    %v443 = vld [vmem:[#allocation4 + $0x78] sm:$0xff]
    %v444 = vld [vmem:[#allocation4 + $0x80] sm:$0xff]
    %v445 = vld [vmem:[#allocation4 + $0x88] sm:$0xff]
    %v446 = vld [vmem:[#allocation4 + $0x90] sm:$0xff]
    %v447 = vld [vmem:[#allocation4 + $0x98] sm:$0xff]
    %v448 = vld [vmem:[#allocation4 + $0xa0] sm:$0xff]
    %v449 = vld [vmem:[#allocation4 + $0xa8] sm:$0xff]
    %v450 = vld [vmem:[#allocation4 + $0xb0] sm:$0xff]
    %v451 = vld [vmem:[#allocation4 + $0xb8] sm:$0xff]
    %v452 = vld [vmem:[#allocation4 + $0xc0] sm:$0xff]
    %v453 = vld [vmem:[#allocation4 + $0xc8] sm:$0xff]
    %v454 = vld [vmem:[#allocation4 + $0xd0] sm:$0xff]
    %v455 = vld [vmem:[#allocation4 + $0xd8] sm:$0xff]
    %v456 = vld [vmem:[#allocation4 + $0xe0] sm:$0xff]
    %v457 = vld [vmem:[#allocation4 + $0xe8] sm:$0xff]
    %v458 = vld [vmem:[#allocation4 + $0xf0] sm:$0xff]
    %v459 = vld [vmem:[#allocation4 + $0xf8] sm:$0xff]
    %v460 = vld [vmem:[#allocation4 + $0x100] sm:$0xff]
    %v461 = vld [vmem:[#allocation4 + $0x108] sm:$0xff]
    %v462 = vld [vmem:[#allocation4 + $0x110] sm:$0xff]
    %v463 = vld [vmem:[#allocation4 + $0x118] sm:$0xff]
    %v464 = vld [vmem:[#allocation4 + $0x120] sm:$0xff]
    %v465 = vld [vmem:[#allocation4 + $0x128] sm:$0xff]
    %v466 = vld [vmem:[#allocation4 + $0x130] sm:$0xff]
    %v467 = vld [vmem:[#allocation4 + $0x138] sm:$0xff]
    %v468 = vld [vmem:[#allocation4 + $0x140] sm:$0xff]
    %v469 = vld [vmem:[#allocation4 + $0x148] sm:$0xff]
    %v470 = vld [vmem:[#allocation4 + $0x150] sm:$0xff]
    %v471 = vld [vmem:[#allocation4 + $0x158] sm:$0xff]
    %v472 = vld [vmem:[#allocation4 + $0x160] sm:$0xff]
    %v473 = vld [vmem:[#allocation4 + $0x168] sm:$0xff]
    %v474 = vld [vmem:[#allocation4 + $0x170] sm:$0xff]
    %v475 = vld [vmem:[#allocation4 + $0x178] sm:$0xff]
    %v476 = vld [vmem:[#allocation4 + $0x180] sm:$0xff]
    %v477 = vld [vmem:[#allocation4 + $0x188] sm:$0xff]
    %v478 = vld [vmem:[#allocation4 + $0x190] sm:$0xff]
    %v479 = vld [vmem:[#allocation4 + $0x198] sm:$0xff]
    %v480 = vld [vmem:[#allocation4 + $0x1a0] sm:$0xff]
    %v481 = vld [vmem:[#allocation4 + $0x1a8] sm:$0xff]
    %v482 = vld [vmem:[#allocation4 + $0x1b0] sm:$0xff]
    %v483 = vld [vmem:[#allocation4 + $0x1b8] sm:$0xff]
    %v484 = vld [vmem:[#allocation4 + $0x1c0] sm:$0xff]
    %v485 = vld [vmem:[#allocation4 + $0x1c8] sm:$0xff]
    %v486 = vld [vmem:[#allocation4 + $0x1d0] sm:$0xff]
    %v487 = vld [vmem:[#allocation4 + $0x1d8] sm:$0xff]
    %v488 = vld [vmem:[#allocation4 + $0x1e0] sm:$0xff]
    %v489 = vld [vmem:[#allocation4 + $0x1e8] sm:$0xff]
    %v490 = vld [vmem:[#allocation4 + $0x1f0] sm:$0xff]
    %v491 = vld [vmem:[#allocation4 + $0x1f8] sm:$0xff]
    %v492 = vld [vmem:[#allocation4 + $0x200] sm:$0xff]
    %v493 = vld [vmem:[#allocation4 + $0x208] sm:$0xff]
    %v494 = vld [vmem:[#allocation4 + $0x210] sm:$0xff]
    %v495 = vld [vmem:[#allocation4 + $0x218] sm:$0xff]
    %v496 = vld [vmem:[#allocation4 + $0x220] sm:$0xff]
    %v497 = vld [vmem:[#allocation4 + $0x228] sm:$0xff]
    %v498 = vld [vmem:[#allocation4 + $0x230] sm:$0xff]
    %v499 = vld [vmem:[#allocation4 + $0x238] sm:$0xff]
    %v500 = vld [vmem:[#allocation4 + $0x240] sm:$0xff]
    %v501 = vld [vmem:[#allocation4 + $0x248] sm:$0xff]
    %v502 = vld [vmem:[#allocation4 + $0x250] sm:$0xff]
    %v503 = vld [vmem:[#allocation4 + $0x258] sm:$0xff]
    %v504 = vld [vmem:[#allocation4 + $0x260] sm:$0xff]
    %v505 = vld [vmem:[#allocation4 + $0x268] sm:$0xff]
    %v506 = vld [vmem:[#allocation4 + $0x270] sm:$0xff]
    %v507 = vld [vmem:[#allocation4 + $0x278] sm:$0xff]
    %v508 = vld [vmem:[#allocation4 + $0x280] sm:$0xff]
    %v509 = vld [vmem:[#allocation4 + $0x288] sm:$0xff]
    %v510 = vld [vmem:[#allocation4 + $0x290] sm:$0xff]
    %v511 = vld [vmem:[#allocation4 + $0x298] sm:$0xff]
    %v512 = vld [vmem:[#allocation4 + $0x2a0] sm:$0xff]
    %v513 = vld [vmem:[#allocation4 + $0x2a8] sm:$0xff]
    %v514 = vld [vmem:[#allocation4 + $0x2b0] sm:$0xff]
    %v515 = vld [vmem:[#allocation4 + $0x2b8] sm:$0xff]
    %v516 = vld [vmem:[#allocation4 + $0x2c0] sm:$0xff]
    %v517 = vld [vmem:[#allocation4 + $0x2c8] sm:$0xff]
    %v518 = vld [vmem:[#allocation4 + $0x2d0] sm:$0xff]
    %v519 = vld [vmem:[#allocation4 + $0x2d8] sm:$0xff]
    %v520 = vld [vmem:[#allocation4 + $0x2e0] sm:$0xff]
    %v521 = vld [vmem:[#allocation4 + $0x2e8] sm:$0xff]
    %v522 = vld [vmem:[#allocation4 + $0x2f0] sm:$0xff]
    %v523 = vld [vmem:[#allocation4 + $0x2f8] sm:$0xff]
    %v524 = vld [vmem:[#allocation4 + $0x300] sm:$0xff]
    %v525 = vld [vmem:[#allocation4 + $0x308] sm:$0xff]
    %v526 = vld [vmem:[#allocation4 + $0x310] sm:$0xff]
    %v527 = vld [vmem:[#allocation4 + $0x318] sm:$0xff]
    %v528 = vld [vmem:[#allocation4 + $0x320] sm:$0xff]
    %v529 = vld [vmem:[#allocation4 + $0x328] sm:$0xff]
    %v530 = vld [vmem:[#allocation4 + $0x330] sm:$0xff]
    %v531 = vld [vmem:[#allocation4 + $0x338] sm:$0xff]
    %v532 = vld [vmem:[#allocation4 + $0x340] sm:$0xff]
    %v533 = vld [vmem:[#allocation4 + $0x348] sm:$0xff]
    %v534 = vld [vmem:[#allocation4 + $0x350] sm:$0xff]
    %v535 = vld [vmem:[#allocation4 + $0x358] sm:$0xff]
    %v536 = vld [vmem:[#allocation4 + $0x360] sm:$0xff]
    %v537 = vld [vmem:[#allocation4 + $0x368] sm:$0xff]
    %v538 = vld [vmem:[#allocation4 + $0x370] sm:$0xff]
    %v539 = vld [vmem:[#allocation4 + $0x378] sm:$0xff]
    %v540 = vld [vmem:[#allocation4 + $0x380] sm:$0xff]
    %v541 = vld [vmem:[#allocation4 + $0x388] sm:$0xff]
    %v542 = vld [vmem:[#allocation4 + $0x390] sm:$0xff]
    %v543 = vld [vmem:[#allocation4 + $0x398] sm:$0xff]
    %v544 = vld [vmem:[#allocation4 + $0x3a0] sm:$0xff]
    %v545 = vld [vmem:[#allocation4 + $0x3a8] sm:$0xff]
    %v546 = vld [vmem:[#allocation4 + $0x3b0] sm:$0xff]
    %v547 = vld [vmem:[#allocation4 + $0x3b8] sm:$0xff]
    %v548 = vld [vmem:[#allocation4 + $0x3c0] sm:$0xff]
    %v549 = vld [vmem:[#allocation4 + $0x3c8] sm:$0xff]
    %v550 = vld [vmem:[#allocation4 + $0x3d0] sm:$0xff]
    %v551 = vld [vmem:[#allocation4 + $0x3d8] sm:$0xff]
    %v552 = vld [vmem:[#allocation4 + $0x3e0] sm:$0xff]
    %v553 = vld [vmem:[#allocation4 + $0x3e8] sm:$0xff]
    %v554 = vld [vmem:[#allocation4 + $0x3f0] sm:$0xff]
    %v555 = vld [vmem:[#allocation4 + $0x3f8] sm:$0xff]
    %v556 = vld [vmem:[%s4] sm:$0xf]
    %v558 = vlaneseq
    %v559 = vshrl.u32 %v558, 7
    %v560 = vsub.s32 0, %v559
    %v561 = vrot.slane %v556, %v560
    %v562 = vlaneseq
    %v563 = vshrl.u32 %v562, 7
    %v564 = vsub.s32 1, %v563
    %v565 = vrot.slane %v556, %v564
    %v566 = vlaneseq
    %v567 = vshrl.u32 %v566, 7
    %v568 = vsub.s32 2, %v567
    %v569 = vrot.slane %v556, %v568
    %v570 = vlaneseq
    %v571 = vshrl.u32 %v570, 7
    %v572 = vsub.s32 3, %v571
    %v573 = vrot.slane %v556, %v572
    %v706 = vunpack.c.l.b16 %v428
    %v707 = vunpack.c.h.b16 %v428
    %v708 = vunpack.c.l.b16 %v429
    %v709 = vunpack.c.h.b16 %v429
    %v710 = vunpack.c.l.b16 %v430
    %v711 = vunpack.c.h.b16 %v430
    %v712 = vunpack.c.l.b16 %v431
    %v713 = vunpack.c.h.b16 %v431
    %v714 = vunpack.c.l.b16 %v432
    %v715 = vunpack.c.h.b16 %v432
    %v716 = vunpack.c.l.b16 %v433
    %v717 = vunpack.c.h.b16 %v433
    %v718 = vunpack.c.l.b16 %v434
    %v719 = vunpack.c.h.b16 %v434
    %v720 = vunpack.c.l.b16 %v435
    %v721 = vunpack.c.h.b16 %v435
    %v722 = vunpack.c.l.b16 %v436
    %v723 = vunpack.c.h.b16 %v436
    %v724 = vunpack.c.l.b16 %v437
    %v725 = vunpack.c.h.b16 %v437
    %v726 = vunpack.c.l.b16 %v438
    %v727 = vunpack.c.h.b16 %v438
    %v728 = vunpack.c.l.b16 %v439
    %v729 = vunpack.c.h.b16 %v439
    %v730 = vunpack.c.l.b16 %v440
    %v731 = vunpack.c.h.b16 %v440
    %v732 = vunpack.c.l.b16 %v441
    %v733 = vunpack.c.h.b16 %v441
    %v734 = vunpack.c.l.b16 %v442
    %v735 = vunpack.c.h.b16 %v442
    %v736 = vunpack.c.l.b16 %v443
    %v737 = vunpack.c.h.b16 %v443
    %v738 = vunpack.c.l.b16 %v444
    %v739 = vunpack.c.h.b16 %v444
    %v740 = vunpack.c.l.b16 %v445
    %v741 = vunpack.c.h.b16 %v445
    %v742 = vunpack.c.l.b16 %v446
    %v743 = vunpack.c.h.b16 %v446
    %v744 = vunpack.c.l.b16 %v447
    %v745 = vunpack.c.h.b16 %v447
    %v746 = vunpack.c.l.b16 %v448
    %v747 = vunpack.c.h.b16 %v448
    %v748 = vunpack.c.l.b16 %v449
    %v749 = vunpack.c.h.b16 %v449
    %v750 = vunpack.c.l.b16 %v450
    %v751 = vunpack.c.h.b16 %v450
    %v752 = vunpack.c.l.b16 %v451
    %v753 = vunpack.c.h.b16 %v451
    %v754 = vunpack.c.l.b16 %v452
    %v755 = vunpack.c.h.b16 %v452
    %v756 = vunpack.c.l.b16 %v453
    %v757 = vunpack.c.h.b16 %v453
    %v758 = vunpack.c.l.b16 %v454
    %v759 = vunpack.c.h.b16 %v454
    %v760 = vunpack.c.l.b16 %v455
    %v761 = vunpack.c.h.b16 %v455
    %v762 = vunpack.c.l.b16 %v456
    %v763 = vunpack.c.h.b16 %v456
    %v764 = vunpack.c.l.b16 %v457
    %v765 = vunpack.c.h.b16 %v457
    %v766 = vunpack.c.l.b16 %v458
    %v767 = vunpack.c.h.b16 %v458
    %v768 = vunpack.c.l.b16 %v459
    %v769 = vunpack.c.h.b16 %v459
    %v770 = vunpack.c.l.b16 %v460
    %v771 = vunpack.c.h.b16 %v460
    %v772 = vunpack.c.l.b16 %v461
    %v773 = vunpack.c.h.b16 %v461
    %v774 = vunpack.c.l.b16 %v462
    %v775 = vunpack.c.h.b16 %v462
    %v776 = vunpack.c.l.b16 %v463
    %v777 = vunpack.c.h.b16 %v463
    %v778 = vunpack.c.l.b16 %v464
    %v779 = vunpack.c.h.b16 %v464
    %v780 = vunpack.c.l.b16 %v465
    %v781 = vunpack.c.h.b16 %v465
    %v782 = vunpack.c.l.b16 %v466
    %v783 = vunpack.c.h.b16 %v466
    %v784 = vunpack.c.l.b16 %v467
    %v785 = vunpack.c.h.b16 %v467
    %v786 = vunpack.c.l.b16 %v468
    %v787 = vunpack.c.h.b16 %v468
    %v788 = vunpack.c.l.b16 %v469
    %v789 = vunpack.c.h.b16 %v469
    %v790 = vunpack.c.l.b16 %v470
    %v791 = vunpack.c.h.b16 %v470
    %v792 = vunpack.c.l.b16 %v471
    %v793 = vunpack.c.h.b16 %v471
    %v794 = vunpack.c.l.b16 %v472
    %v795 = vunpack.c.h.b16 %v472
    %v796 = vunpack.c.l.b16 %v473
    %v797 = vunpack.c.h.b16 %v473
    %v798 = vunpack.c.l.b16 %v474
    %v799 = vunpack.c.h.b16 %v474
    %v800 = vunpack.c.l.b16 %v475
    %v801 = vunpack.c.h.b16 %v475
    %v802 = vunpack.c.l.b16 %v476
    %v803 = vunpack.c.h.b16 %v476
    %v804 = vunpack.c.l.b16 %v477
    %v805 = vunpack.c.h.b16 %v477
    %v806 = vunpack.c.l.b16 %v478
    %v807 = vunpack.c.h.b16 %v478
    %v808 = vunpack.c.l.b16 %v479
    %v809 = vunpack.c.h.b16 %v479
    %v810 = vunpack.c.l.b16 %v480
    %v811 = vunpack.c.h.b16 %v480
    %v812 = vunpack.c.l.b16 %v481
    %v813 = vunpack.c.h.b16 %v481
    %v814 = vunpack.c.l.b16 %v482
    %v815 = vunpack.c.h.b16 %v482
    %v816 = vunpack.c.l.b16 %v483
    %v817 = vunpack.c.h.b16 %v483
    %v818 = vunpack.c.l.b16 %v484
    %v819 = vunpack.c.h.b16 %v484
    %v820 = vunpack.c.l.b16 %v485
    %v821 = vunpack.c.h.b16 %v485
    %v822 = vunpack.c.l.b16 %v486
    %v823 = vunpack.c.h.b16 %v486
    %v824 = vunpack.c.l.b16 %v487
    %v825 = vunpack.c.h.b16 %v487
    %v826 = vunpack.c.l.b16 %v488
    %v827 = vunpack.c.h.b16 %v488
    %v828 = vunpack.c.l.b16 %v489
    %v829 = vunpack.c.h.b16 %v489
    %v830 = vunpack.c.l.b16 %v490
    %v831 = vunpack.c.h.b16 %v490
    %v832 = vunpack.c.l.b16 %v491
    %v833 = vunpack.c.h.b16 %v491
    %v834 = vunpack.c.l.b16 %v492
    %v835 = vunpack.c.h.b16 %v492
    %v836 = vunpack.c.l.b16 %v493
    %v837 = vunpack.c.h.b16 %v493
    %v838 = vunpack.c.l.b16 %v494
    %v839 = vunpack.c.h.b16 %v494
    %v840 = vunpack.c.l.b16 %v495
    %v841 = vunpack.c.h.b16 %v495
    %v842 = vunpack.c.l.b16 %v496
    %v843 = vunpack.c.h.b16 %v496
    %v844 = vunpack.c.l.b16 %v497
    %v845 = vunpack.c.h.b16 %v497
    %v846 = vunpack.c.l.b16 %v498
    %v847 = vunpack.c.h.b16 %v498
    %v848 = vunpack.c.l.b16 %v499
    %v849 = vunpack.c.h.b16 %v499
    %v850 = vunpack.c.l.b16 %v500
    %v851 = vunpack.c.h.b16 %v500
    %v852 = vunpack.c.l.b16 %v501
    %v853 = vunpack.c.h.b16 %v501
    %v854 = vunpack.c.l.b16 %v502
    %v855 = vunpack.c.h.b16 %v502
    %v856 = vunpack.c.l.b16 %v503
    %v857 = vunpack.c.h.b16 %v503
    %v858 = vunpack.c.l.b16 %v504
    %v859 = vunpack.c.h.b16 %v504
    %v860 = vunpack.c.l.b16 %v505
    %v861 = vunpack.c.h.b16 %v505
    %v862 = vunpack.c.l.b16 %v506
    %v863 = vunpack.c.h.b16 %v506
    %v864 = vunpack.c.l.b16 %v507
    %v865 = vunpack.c.h.b16 %v507
    %v866 = vunpack.c.l.b16 %v508
    %v867 = vunpack.c.h.b16 %v508
    %v868 = vunpack.c.l.b16 %v509
    %v869 = vunpack.c.h.b16 %v509
    %v870 = vunpack.c.l.b16 %v510
    %v871 = vunpack.c.h.b16 %v510
    %v872 = vunpack.c.l.b16 %v511
    %v873 = vunpack.c.h.b16 %v511
    %v874 = vunpack.c.l.b16 %v512
    %v875 = vunpack.c.h.b16 %v512
    %v876 = vunpack.c.l.b16 %v513
    %v877 = vunpack.c.h.b16 %v513
    %v878 = vunpack.c.l.b16 %v514
    %v879 = vunpack.c.h.b16 %v514
    %v880 = vunpack.c.l.b16 %v515
    %v881 = vunpack.c.h.b16 %v515
    %v882 = vunpack.c.l.b16 %v516
    %v883 = vunpack.c.h.b16 %v516
    %v884 = vunpack.c.l.b16 %v517
    %v885 = vunpack.c.h.b16 %v517
    %v886 = vunpack.c.l.b16 %v518
    %v887 = vunpack.c.h.b16 %v518
    %v888 = vunpack.c.l.b16 %v519
    %v889 = vunpack.c.h.b16 %v519
    %v890 = vunpack.c.l.b16 %v520
    %v891 = vunpack.c.h.b16 %v520
    %v892 = vunpack.c.l.b16 %v521
    %v893 = vunpack.c.h.b16 %v521
    %v894 = vunpack.c.l.b16 %v522
    %v895 = vunpack.c.h.b16 %v522
    %v896 = vunpack.c.l.b16 %v523
    %v897 = vunpack.c.h.b16 %v523
    %v898 = vunpack.c.l.b16 %v524
    %v899 = vunpack.c.h.b16 %v524
    %v900 = vunpack.c.l.b16 %v525
    %v901 = vunpack.c.h.b16 %v525
    %v902 = vunpack.c.l.b16 %v526
    %v903 = vunpack.c.h.b16 %v526
    %v904 = vunpack.c.l.b16 %v527
    %v905 = vunpack.c.h.b16 %v527
    %v906 = vunpack.c.l.b16 %v528
    %v907 = vunpack.c.h.b16 %v528
    %v908 = vunpack.c.l.b16 %v529
    %v909 = vunpack.c.h.b16 %v529
    %v910 = vunpack.c.l.b16 %v530
    %v911 = vunpack.c.h.b16 %v530
    %v912 = vunpack.c.l.b16 %v531
    %v913 = vunpack.c.h.b16 %v531
    %v914 = vunpack.c.l.b16 %v532
    %v915 = vunpack.c.h.b16 %v532
    %v916 = vunpack.c.l.b16 %v533
    %v917 = vunpack.c.h.b16 %v533
    %v918 = vunpack.c.l.b16 %v534
    %v919 = vunpack.c.h.b16 %v534
    %v920 = vunpack.c.l.b16 %v535
    %v921 = vunpack.c.h.b16 %v535
    %v922 = vunpack.c.l.b16 %v536
    %v923 = vunpack.c.h.b16 %v536
    %v924 = vunpack.c.l.b16 %v537
    %v925 = vunpack.c.h.b16 %v537
    %v926 = vunpack.c.l.b16 %v538
    %v927 = vunpack.c.h.b16 %v538
    %v928 = vunpack.c.l.b16 %v539
    %v929 = vunpack.c.h.b16 %v539
    %v930 = vunpack.c.l.b16 %v540
    %v931 = vunpack.c.h.b16 %v540
    %v932 = vunpack.c.l.b16 %v541
    %v933 = vunpack.c.h.b16 %v541
    %v934 = vunpack.c.l.b16 %v542
    %v935 = vunpack.c.h.b16 %v542
    %v936 = vunpack.c.l.b16 %v543
    %v937 = vunpack.c.h.b16 %v543
    %v938 = vunpack.c.l.b16 %v544
    %v939 = vunpack.c.h.b16 %v544
    %v940 = vunpack.c.l.b16 %v545
    %v941 = vunpack.c.h.b16 %v545
    %v942 = vunpack.c.l.b16 %v546
    %v943 = vunpack.c.h.b16 %v546
    %v944 = vunpack.c.l.b16 %v547
    %v945 = vunpack.c.h.b16 %v547
    %v946 = vunpack.c.l.b16 %v548
    %v947 = vunpack.c.h.b16 %v548
    %v948 = vunpack.c.l.b16 %v549
    %v949 = vunpack.c.h.b16 %v549
    %v950 = vunpack.c.l.b16 %v550
    %v951 = vunpack.c.h.b16 %v550
    %v952 = vunpack.c.l.b16 %v551
    %v953 = vunpack.c.h.b16 %v551
    %v954 = vunpack.c.l.b16 %v552
    %v955 = vunpack.c.h.b16 %v552
    %v956 = vunpack.c.l.b16 %v553
    %v957 = vunpack.c.h.b16 %v553
    %v958 = vunpack.c.l.b16 %v554
    %v959 = vunpack.c.h.b16 %v554
    %v960 = vunpack.c.l.b16 %v555
    %v961 = vunpack.c.h.b16 %v555
    %v962 = vpack.c.b16 %v710, %v706
    %v963 = vpack.c.b16 %v711, %v707
    %v964 = vpack.c.b16 %v712, %v708
    %v965 = vpack.c.b16 %v713, %v709
    %v966 = vpack.c.b16 %v718, %v714
    %v967 = vpack.c.b16 %v719, %v715
    %v968 = vpack.c.b16 %v720, %v716
    %v969 = vpack.c.b16 %v721, %v717
    %v970 = vpack.c.b16 %v726, %v722
    %v971 = vpack.c.b16 %v727, %v723
    %v972 = vpack.c.b16 %v728, %v724
    %v973 = vpack.c.b16 %v729, %v725
    %v974 = vpack.c.b16 %v734, %v730
    %v975 = vpack.c.b16 %v735, %v731
    %v976 = vpack.c.b16 %v736, %v732
    %v977 = vpack.c.b16 %v737, %v733
    %v978 = vpack.c.b16 %v742, %v738
    %v979 = vpack.c.b16 %v743, %v739
    %v980 = vpack.c.b16 %v744, %v740
    %v981 = vpack.c.b16 %v745, %v741
    %v982 = vpack.c.b16 %v750, %v746
    %v983 = vpack.c.b16 %v751, %v747
    %v984 = vpack.c.b16 %v752, %v748
    %v985 = vpack.c.b16 %v753, %v749
    %v986 = vpack.c.b16 %v758, %v754
    %v987 = vpack.c.b16 %v759, %v755
    %v988 = vpack.c.b16 %v760, %v756
    %v989 = vpack.c.b16 %v761, %v757
    %v990 = vpack.c.b16 %v766, %v762
    %v991 = vpack.c.b16 %v767, %v763
    %v992 = vpack.c.b16 %v768, %v764
    %v993 = vpack.c.b16 %v769, %v765
    %v994 = vpack.c.b16 %v774, %v770
    %v995 = vpack.c.b16 %v775, %v771
    %v996 = vpack.c.b16 %v776, %v772
    %v997 = vpack.c.b16 %v777, %v773
    %v998 = vpack.c.b16 %v782, %v778
    %v999 = vpack.c.b16 %v783, %v779
    %v1000 = vpack.c.b16 %v784, %v780
    %v1001 = vpack.c.b16 %v785, %v781
    %v1002 = vpack.c.b16 %v790, %v786
    %v1003 = vpack.c.b16 %v791, %v787
    %v1004 = vpack.c.b16 %v792, %v788
    %v1005 = vpack.c.b16 %v793, %v789
    %v1006 = vpack.c.b16 %v798, %v794
    %v1007 = vpack.c.b16 %v799, %v795
    %v1008 = vpack.c.b16 %v800, %v796
    %v1009 = vpack.c.b16 %v801, %v797
    %v1010 = vpack.c.b16 %v806, %v802
    %v1011 = vpack.c.b16 %v807, %v803
    %v1012 = vpack.c.b16 %v808, %v804
    %v1013 = vpack.c.b16 %v809, %v805
    %v1014 = vpack.c.b16 %v814, %v810
    %v1015 = vpack.c.b16 %v815, %v811
    %v1016 = vpack.c.b16 %v816, %v812
    %v1017 = vpack.c.b16 %v817, %v813
    %v1018 = vpack.c.b16 %v822, %v818
    %v1019 = vpack.c.b16 %v823, %v819
    %v1020 = vpack.c.b16 %v824, %v820
    %v1021 = vpack.c.b16 %v825, %v821
    %v1022 = vpack.c.b16 %v830, %v826
    %v1023 = vpack.c.b16 %v831, %v827
    %v1024 = vpack.c.b16 %v832, %v828
    %v1025 = vpack.c.b16 %v833, %v829
    %v1026 = vpack.c.b16 %v838, %v834
    %v1027 = vpack.c.b16 %v839, %v835
    %v1028 = vpack.c.b16 %v840, %v836
    %v1029 = vpack.c.b16 %v841, %v837
    %v1030 = vpack.c.b16 %v846, %v842
    %v1031 = vpack.c.b16 %v847, %v843
    %v1032 = vpack.c.b16 %v848, %v844
    %v1033 = vpack.c.b16 %v849, %v845
    %v1034 = vpack.c.b16 %v854, %v850
    %v1035 = vpack.c.b16 %v855, %v851
    %v1036 = vpack.c.b16 %v856, %v852
    %v1037 = vpack.c.b16 %v857, %v853
    %v1038 = vpack.c.b16 %v862, %v858
    %v1039 = vpack.c.b16 %v863, %v859
    %v1040 = vpack.c.b16 %v864, %v860
    %v1041 = vpack.c.b16 %v865, %v861
    %v1042 = vpack.c.b16 %v870, %v866
    %v1043 = vpack.c.b16 %v871, %v867
    %v1044 = vpack.c.b16 %v872, %v868
    %v1045 = vpack.c.b16 %v873, %v869
    %v1046 = vpack.c.b16 %v878, %v874
    %v1047 = vpack.c.b16 %v879, %v875
    %v1048 = vpack.c.b16 %v880, %v876
    %v1049 = vpack.c.b16 %v881, %v877
    %v1050 = vpack.c.b16 %v886, %v882
    %v1051 = vpack.c.b16 %v887, %v883
    %v1052 = vpack.c.b16 %v888, %v884
    %v1053 = vpack.c.b16 %v889, %v885
    %v1054 = vpack.c.b16 %v894, %v890
    %v1055 = vpack.c.b16 %v895, %v891
    %v1056 = vpack.c.b16 %v896, %v892
    %v1057 = vpack.c.b16 %v897, %v893
    %v1058 = vpack.c.b16 %v902, %v898
    %v1059 = vpack.c.b16 %v903, %v899
    %v1060 = vpack.c.b16 %v904, %v900
    %v1061 = vpack.c.b16 %v905, %v901
    %v1062 = vpack.c.b16 %v910, %v906
    %v1063 = vpack.c.b16 %v911, %v907
    %v1064 = vpack.c.b16 %v912, %v908
    %v1065 = vpack.c.b16 %v913, %v909
    %v1066 = vpack.c.b16 %v918, %v914
    %v1067 = vpack.c.b16 %v919, %v915
    %v1068 = vpack.c.b16 %v920, %v916
    %v1069 = vpack.c.b16 %v921, %v917
    %v1070 = vpack.c.b16 %v926, %v922
    %v1071 = vpack.c.b16 %v927, %v923
    %v1072 = vpack.c.b16 %v928, %v924
    %v1073 = vpack.c.b16 %v929, %v925
    %v1074 = vpack.c.b16 %v934, %v930
    %v1075 = vpack.c.b16 %v935, %v931
    %v1076 = vpack.c.b16 %v936, %v932
    %v1077 = vpack.c.b16 %v937, %v933
    %v1078 = vpack.c.b16 %v942, %v938
    %v1079 = vpack.c.b16 %v943, %v939
    %v1080 = vpack.c.b16 %v944, %v940
    %v1081 = vpack.c.b16 %v945, %v941
    %v1082 = vpack.c.b16 %v950, %v946
    %v1083 = vpack.c.b16 %v951, %v947
    %v1084 = vpack.c.b16 %v952, %v948
    %v1085 = vpack.c.b16 %v953, %v949
    %v1086 = vpack.c.b16 %v958, %v954
    %v1087 = vpack.c.b16 %v959, %v955
    %v1088 = vpack.c.b16 %v960, %v956
    %v1089 = vpack.c.b16 %v961, %v957
    %1218 = vmatprep.subr.bf16.mxu0 %v991
    %1219 = vmatpush1.bf16.msra.mxu0 %v990
    %1220 = vmatprep.subr.bf16.mxu0 %v987
    %1221 = vmatpush1.bf16.msra.mxu0 %v986
    %1222 = vmatprep.subr.bf16.mxu0 %v983
    %1223 = vmatpush1.bf16.msra.mxu0 %v982
    %1224 = vmatprep.subr.bf16.mxu0 %v979
    %1225 = vmatpush1.bf16.msra.mxu0 %v978
    %1226 = vmatprep.subr.bf16.mxu0 %v975
    %1227 = vmatpush1.bf16.msra.mxu0 %v974
    %1228 = vmatprep.subr.bf16.mxu0 %v971
    %1229 = vmatpush1.bf16.msra.mxu0 %v970
    %1230 = vmatprep.subr.bf16.mxu0 %v967
    %1231 = vmatpush1.bf16.msra.mxu0 %v966
    %1232 = vmatprep.subr.bf16.mxu0 %v963
    %1233 = vmatpush1.bf16.msra.mxu0 %v962
    %1234 = vmatprep.subr.bf16.mxu0 %v1023
    %1235 = vmatpush2.bf16.msra.mxu0 %v1022
    %1236 = vmatprep.subr.bf16.mxu0 %v1019
    %1237 = vmatpush2.bf16.msra.mxu0 %v1018
    %1238 = vmatprep.subr.bf16.mxu0 %v1015
    %1239 = vmatpush2.bf16.msra.mxu0 %v1014
    %1240 = vmatprep.subr.bf16.mxu0 %v1011
    %1241 = vmatpush2.bf16.msra.mxu0 %v1010
    %1242 = vmatprep.subr.bf16.mxu0 %v1007
    %1243 = vmatpush2.bf16.msra.mxu0 %v1006
    %1244 = vmatprep.subr.bf16.mxu0 %v1003
    %1245 = vmatpush2.bf16.msra.mxu0 %v1002
    %1246 = vmatprep.subr.bf16.mxu0 %v999
    %1247 = vmatpush2.bf16.msra.mxu0 %v998
    %1248 = vmatprep.subr.bf16.mxu0 %v995
    %1249 = vmatpush2.bf16.msra.mxu0 %v994
    %1250 = vmatprep.mubr.bf16.mxu0 %v425
    %1251 = vmatmul.mubr.bf16.gmra.mxu0 %v424
    %v1252 = vpop.f32.mrf.mxu0
    %v1253 = vadd.f32 %v561, %v1252
    %v1254 = vpop.f32.mrf.mxu0
    %v1255 = vadd.f32 %v565, %v1254
    %v1256 = vpop.f32.mrf.mxu0
    %v1257 = vpop.f32.mrf.mxu0
    %1258 = vdwg.mxu0
    %1259 = vmatprep.subr.bf16.mxu0 %v1055
    %1260 = vmatpush1.bf16.msra.mxu0 %v1054
    %1261 = vmatprep.subr.bf16.mxu0 %v1051
    %1262 = vmatpush1.bf16.msra.mxu0 %v1050
    %1263 = vmatprep.subr.bf16.mxu0 %v1047
    %1264 = vmatpush1.bf16.msra.mxu0 %v1046
    %1265 = vmatprep.subr.bf16.mxu0 %v1043
    %1266 = vmatpush1.bf16.msra.mxu0 %v1042
    %1267 = vmatprep.subr.bf16.mxu0 %v1039
    %1268 = vmatpush1.bf16.msra.mxu0 %v1038
    %1269 = vmatprep.subr.bf16.mxu0 %v1035
    %1270 = vmatpush1.bf16.msra.mxu0 %v1034
    %1271 = vmatprep.subr.bf16.mxu0 %v1031
    %1272 = vmatpush1.bf16.msra.mxu0 %v1030
    %1273 = vmatprep.subr.bf16.mxu0 %v1027
    %1274 = vmatpush1.bf16.msra.mxu0 %v1026
    %1275 = vmatprep.subr.bf16.mxu0 %v1087
    %1276 = vmatpush2.bf16.msra.mxu0 %v1086
    %1277 = vmatprep.subr.bf16.mxu0 %v1083
    %1278 = vmatpush2.bf16.msra.mxu0 %v1082
    %1279 = vmatprep.subr.bf16.mxu0 %v1079
    %1280 = vmatpush2.bf16.msra.mxu0 %v1078
    %1281 = vmatprep.subr.bf16.mxu0 %v1075
    %1282 = vmatpush2.bf16.msra.mxu0 %v1074
    %1283 = vmatprep.subr.bf16.mxu0 %v1071
    %1284 = vmatpush2.bf16.msra.mxu0 %v1070
    %1285 = vmatprep.subr.bf16.mxu0 %v1067
    %1286 = vmatpush2.bf16.msra.mxu0 %v1066
    %1287 = vmatprep.subr.bf16.mxu0 %v1063
    %1288 = vmatpush2.bf16.msra.mxu0 %v1062
    %1289 = vmatprep.subr.bf16.mxu0 %v1059
    %1290 = vmatpush2.bf16.msra.mxu0 %v1058
    %1291 = vmatprep.mubr.bf16.mxu0 %v427
    %1292 = vmatmul.mubr.bf16.gmra.mxu0 %v426
    %v1293 = vpop.f32.mrf.mxu0
    %v1294 = vadd.f32 %v1253, %v1293
    %v1295 = vpop.f32.mrf.mxu0
    %v1296 = vadd.f32 %v1255, %v1295
    %v1297 = vpop.f32.mrf.mxu0
    %v1298 = vpop.f32.mrf.mxu0
    %1299 = vdwg.mxu0
    %1300 = vmatprep.subr.bf16.mxu0 %v993
    %1301 = vmatpush1.bf16.msra.mxu0 %v992
    %1302 = vmatprep.subr.bf16.mxu0 %v989
    %1303 = vmatpush1.bf16.msra.mxu0 %v988
    %1304 = vmatprep.subr.bf16.mxu0 %v985
    %1305 = vmatpush1.bf16.msra.mxu0 %v984
    %1306 = vmatprep.subr.bf16.mxu0 %v981
    %1307 = vmatpush1.bf16.msra.mxu0 %v980
    %1308 = vmatprep.subr.bf16.mxu0 %v977
    %1309 = vmatpush1.bf16.msra.mxu0 %v976
    %1310 = vmatprep.subr.bf16.mxu0 %v973
    %1311 = vmatpush1.bf16.msra.mxu0 %v972
    %1312 = vmatprep.subr.bf16.mxu0 %v969
    %1313 = vmatpush1.bf16.msra.mxu0 %v968
    %1314 = vmatprep.subr.bf16.mxu0 %v965
    %1315 = vmatpush1.bf16.msra.mxu0 %v964
    %1316 = vmatprep.subr.bf16.mxu0 %v1025
    %1317 = vmatpush2.bf16.msra.mxu0 %v1024
    %1318 = vmatprep.subr.bf16.mxu0 %v1021
    %1319 = vmatpush2.bf16.msra.mxu0 %v1020
    %1320 = vmatprep.subr.bf16.mxu0 %v1017
    %1321 = vmatpush2.bf16.msra.mxu0 %v1016
    %1322 = vmatprep.subr.bf16.mxu0 %v1013
    %1323 = vmatpush2.bf16.msra.mxu0 %v1012
    %1324 = vmatprep.subr.bf16.mxu0 %v1009
    %1325 = vmatpush2.bf16.msra.mxu0 %v1008
    %1326 = vmatprep.subr.bf16.mxu0 %v1005
    %1327 = vmatpush2.bf16.msra.mxu0 %v1004
    %1328 = vmatprep.subr.bf16.mxu0 %v1001
    %1329 = vmatpush2.bf16.msra.mxu0 %v1000
    %1330 = vmatprep.subr.bf16.mxu0 %v997
    %1331 = vmatpush2.bf16.msra.mxu0 %v996
    %1332 = vmatprep.mubr.bf16.mxu0 %v425
    %1333 = vmatmul.mubr.bf16.gmra.mxu0 %v424
    %v1334 = vpop.f32.mrf.mxu0
    %v1335 = vadd.f32 %v569, %v1334
    %v1336 = vpop.f32.mrf.mxu0
    %v1337 = vadd.f32 %v573, %v1336
    %v1338 = vpop.f32.mrf.mxu0
    %v1339 = vpop.f32.mrf.mxu0
    %1340 = vdwg.mxu0
    %1341 = vmatprep.subr.bf16.mxu0 %v1057
    %1342 = vmatpush1.bf16.msra.mxu0 %v1056
    %1343 = vmatprep.subr.bf16.mxu0 %v1053
    %1344 = vmatpush1.bf16.msra.mxu0 %v1052
    %1345 = vmatprep.subr.bf16.mxu0 %v1049
    %1346 = vmatpush1.bf16.msra.mxu0 %v1048
    %1347 = vmatprep.subr.bf16.mxu0 %v1045
    %1348 = vmatpush1.bf16.msra.mxu0 %v1044
    %1349 = vmatprep.subr.bf16.mxu0 %v1041
    %1350 = vmatpush1.bf16.msra.mxu0 %v1040
    %1351 = vmatprep.subr.bf16.mxu0 %v1037
    %1352 = vmatpush1.bf16.msra.mxu0 %v1036
    %1353 = vmatprep.subr.bf16.mxu0 %v1033
    %1354 = vmatpush1.bf16.msra.mxu0 %v1032
    %1355 = vmatprep.subr.bf16.mxu0 %v1029
    %1356 = vmatpush1.bf16.msra.mxu0 %v1028
    %1357 = vmatprep.subr.bf16.mxu0 %v1089
    %1358 = vmatpush2.bf16.msra.mxu0 %v1088
    %1359 = vmatprep.subr.bf16.mxu0 %v1085
    %1360 = vmatpush2.bf16.msra.mxu0 %v1084
    %1361 = vmatprep.subr.bf16.mxu0 %v1081
    %1362 = vmatpush2.bf16.msra.mxu0 %v1080
    %1363 = vmatprep.subr.bf16.mxu0 %v1077
    %1364 = vmatpush2.bf16.msra.mxu0 %v1076
    %1365 = vmatprep.subr.bf16.mxu0 %v1073
    %1366 = vmatpush2.bf16.msra.mxu0 %v1072
    %1367 = vmatprep.subr.bf16.mxu0 %v1069
    %1368 = vmatpush2.bf16.msra.mxu0 %v1068
    %1369 = vmatprep.subr.bf16.mxu0 %v1065
    %1370 = vmatpush2.bf16.msra.mxu0 %v1064
    %1371 = vmatprep.subr.bf16.mxu0 %v1061
    %1372 = vmatpush2.bf16.msra.mxu0 %v1060
    %1373 = vmatprep.mubr.bf16.mxu0 %v427
    %1374 = vmatmul.mubr.bf16.gmra.mxu0 %v426
    %v1375 = vpop.f32.mrf.mxu0
    %v1376 = vadd.f32 %v1335, %v1375
    %v1377 = vpop.f32.mrf.mxu0
    %v1378 = vadd.f32 %v1337, %v1377
    %v1379 = vpop.f32.mrf.mxu0
    %v1380 = vpop.f32.mrf.mxu0
    %1381 = vdwg.mxu0
    %v1382 = vmax.f32 %v1294, 0.0
    %v1383 = vmax.f32 %v1296, 0.0
    %v1384 = vmax.f32 %v1376, 0.0
    %v1385 = vmax.f32 %v1378, 0.0
    %v1386 = vpack.c.bf16 %v1382, %v1382
    %v1387 = vpack.c.bf16 %v1383, %v1383
    %v1388 = vpack.c.bf16 %v1384, %v1384
    %v1389 = vpack.c.bf16 %v1385, %v1385
    %v1390 = vld [vmem:[#allocation6] sm:$0xff]
    %v1391 = vld [vmem:[#allocation6 + $0x8] sm:$0xff]
    %v1392 = vld [vmem:[#allocation6 + $0x10] sm:$0xff]
    %v1393 = vld [vmem:[#allocation6 + $0x18] sm:$0xff]
    %v1394 = vld [vmem:[#allocation6 + $0x20] sm:$0xff]
    %v1395 = vld [vmem:[#allocation6 + $0x28] sm:$0xff]
    %v1396 = vld [vmem:[#allocation6 + $0x30] sm:$0xff]
    %v1397 = vld [vmem:[#allocation6 + $0x38] sm:$0xff]
    %v1398 = vld [vmem:[#allocation6 + $0x40] sm:$0xff]
    %v1399 = vld [vmem:[#allocation6 + $0x48] sm:$0xff]
    %v1400 = vld [vmem:[#allocation6 + $0x50] sm:$0xff]
    %v1401 = vld [vmem:[#allocation6 + $0x58] sm:$0xff]
    %v1402 = vld [vmem:[#allocation6 + $0x60] sm:$0xff]
    %v1403 = vld [vmem:[#allocation6 + $0x68] sm:$0xff]
    %v1404 = vld [vmem:[#allocation6 + $0x70] sm:$0xff]
    %v1405 = vld [vmem:[#allocation6 + $0x78] sm:$0xff]
    %v1406 = vld [vmem:[#allocation6 + $0x80] sm:$0xff]
    %v1407 = vld [vmem:[#allocation6 + $0x88] sm:$0xff]
    %v1408 = vld [vmem:[#allocation6 + $0x90] sm:$0xff]
    %v1409 = vld [vmem:[#allocation6 + $0x98] sm:$0xff]
    %v1410 = vld [vmem:[#allocation6 + $0xa0] sm:$0xff]
    %v1411 = vld [vmem:[#allocation6 + $0xa8] sm:$0xff]
    %v1412 = vld [vmem:[#allocation6 + $0xb0] sm:$0xff]
    %v1413 = vld [vmem:[#allocation6 + $0xb8] sm:$0xff]
    %v1414 = vld [vmem:[#allocation6 + $0xc0] sm:$0xff]
    %v1415 = vld [vmem:[#allocation6 + $0xc8] sm:$0xff]
    %v1416 = vld [vmem:[#allocation6 + $0xd0] sm:$0xff]
    %v1417 = vld [vmem:[#allocation6 + $0xd8] sm:$0xff]
    %v1418 = vld [vmem:[#allocation6 + $0xe0] sm:$0xff]
    %v1419 = vld [vmem:[#allocation6 + $0xe8] sm:$0xff]
    %v1420 = vld [vmem:[#allocation6 + $0xf0] sm:$0xff]
    %v1421 = vld [vmem:[#allocation6 + $0xf8] sm:$0xff]
    %v1422 = vld [vmem:[#allocation6 + $0x100] sm:$0xff]
    %v1423 = vld [vmem:[#allocation6 + $0x108] sm:$0xff]
    %v1424 = vld [vmem:[#allocation6 + $0x110] sm:$0xff]
    %v1425 = vld [vmem:[#allocation6 + $0x118] sm:$0xff]
    %v1426 = vld [vmem:[#allocation6 + $0x120] sm:$0xff]
    %v1427 = vld [vmem:[#allocation6 + $0x128] sm:$0xff]
    %v1428 = vld [vmem:[#allocation6 + $0x130] sm:$0xff]
    %v1429 = vld [vmem:[#allocation6 + $0x138] sm:$0xff]
    %v1430 = vld [vmem:[#allocation6 + $0x140] sm:$0xff]
    %v1431 = vld [vmem:[#allocation6 + $0x148] sm:$0xff]
    %v1432 = vld [vmem:[#allocation6 + $0x150] sm:$0xff]
    %v1433 = vld [vmem:[#allocation6 + $0x158] sm:$0xff]
    %v1434 = vld [vmem:[#allocation6 + $0x160] sm:$0xff]
    %v1435 = vld [vmem:[#allocation6 + $0x168] sm:$0xff]
    %v1436 = vld [vmem:[#allocation6 + $0x170] sm:$0xff]
    %v1437 = vld [vmem:[#allocation6 + $0x178] sm:$0xff]
    %v1438 = vld [vmem:[#allocation6 + $0x180] sm:$0xff]
    %v1439 = vld [vmem:[#allocation6 + $0x188] sm:$0xff]
    %v1440 = vld [vmem:[#allocation6 + $0x190] sm:$0xff]
    %v1441 = vld [vmem:[#allocation6 + $0x198] sm:$0xff]
    %v1442 = vld [vmem:[#allocation6 + $0x1a0] sm:$0xff]
    %v1443 = vld [vmem:[#allocation6 + $0x1a8] sm:$0xff]
    %v1444 = vld [vmem:[#allocation6 + $0x1b0] sm:$0xff]
    %v1445 = vld [vmem:[#allocation6 + $0x1b8] sm:$0xff]
    %v1446 = vld [vmem:[#allocation6 + $0x1c0] sm:$0xff]
    %v1447 = vld [vmem:[#allocation6 + $0x1c8] sm:$0xff]
    %v1448 = vld [vmem:[#allocation6 + $0x1d0] sm:$0xff]
    %v1449 = vld [vmem:[#allocation6 + $0x1d8] sm:$0xff]
    %v1450 = vld [vmem:[#allocation6 + $0x1e0] sm:$0xff]
    %v1451 = vld [vmem:[#allocation6 + $0x1e8] sm:$0xff]
    %v1452 = vld [vmem:[#allocation6 + $0x1f0] sm:$0xff]
    %v1453 = vld [vmem:[#allocation6 + $0x1f8] sm:$0xff]
    %v1454 = vld [vmem:[#allocation6 + $0x200] sm:$0xff]
    %v1455 = vld [vmem:[#allocation6 + $0x208] sm:$0xff]
    %v1456 = vld [vmem:[#allocation6 + $0x210] sm:$0xff]
    %v1457 = vld [vmem:[#allocation6 + $0x218] sm:$0xff]
    %v1458 = vld [vmem:[#allocation6 + $0x220] sm:$0xff]
    %v1459 = vld [vmem:[#allocation6 + $0x228] sm:$0xff]
    %v1460 = vld [vmem:[#allocation6 + $0x230] sm:$0xff]
    %v1461 = vld [vmem:[#allocation6 + $0x238] sm:$0xff]
    %v1462 = vld [vmem:[#allocation6 + $0x240] sm:$0xff]
    %v1463 = vld [vmem:[#allocation6 + $0x248] sm:$0xff]
    %v1464 = vld [vmem:[#allocation6 + $0x250] sm:$0xff]
    %v1465 = vld [vmem:[#allocation6 + $0x258] sm:$0xff]
    %v1466 = vld [vmem:[#allocation6 + $0x260] sm:$0xff]
    %v1467 = vld [vmem:[#allocation6 + $0x268] sm:$0xff]
    %v1468 = vld [vmem:[#allocation6 + $0x270] sm:$0xff]
    %v1469 = vld [vmem:[#allocation6 + $0x278] sm:$0xff]
    %v1470 = vld [vmem:[#allocation6 + $0x280] sm:$0xff]
    %v1471 = vld [vmem:[#allocation6 + $0x288] sm:$0xff]
    %v1472 = vld [vmem:[#allocation6 + $0x290] sm:$0xff]
    %v1473 = vld [vmem:[#allocation6 + $0x298] sm:$0xff]
    %v1474 = vld [vmem:[#allocation6 + $0x2a0] sm:$0xff]
    %v1475 = vld [vmem:[#allocation6 + $0x2a8] sm:$0xff]
    %v1476 = vld [vmem:[#allocation6 + $0x2b0] sm:$0xff]
    %v1477 = vld [vmem:[#allocation6 + $0x2b8] sm:$0xff]
    %v1478 = vld [vmem:[#allocation6 + $0x2c0] sm:$0xff]
    %v1479 = vld [vmem:[#allocation6 + $0x2c8] sm:$0xff]
    %v1480 = vld [vmem:[#allocation6 + $0x2d0] sm:$0xff]
    %v1481 = vld [vmem:[#allocation6 + $0x2d8] sm:$0xff]
    %v1482 = vld [vmem:[#allocation6 + $0x2e0] sm:$0xff]
    %v1483 = vld [vmem:[#allocation6 + $0x2e8] sm:$0xff]
    %v1484 = vld [vmem:[#allocation6 + $0x2f0] sm:$0xff]
    %v1485 = vld [vmem:[#allocation6 + $0x2f8] sm:$0xff]
    %v1486 = vld [vmem:[#allocation6 + $0x300] sm:$0xff]
    %v1487 = vld [vmem:[#allocation6 + $0x308] sm:$0xff]
    %v1488 = vld [vmem:[#allocation6 + $0x310] sm:$0xff]
    %v1489 = vld [vmem:[#allocation6 + $0x318] sm:$0xff]
    %v1490 = vld [vmem:[#allocation6 + $0x320] sm:$0xff]
    %v1491 = vld [vmem:[#allocation6 + $0x328] sm:$0xff]
    %v1492 = vld [vmem:[#allocation6 + $0x330] sm:$0xff]
    %v1493 = vld [vmem:[#allocation6 + $0x338] sm:$0xff]
    %v1494 = vld [vmem:[#allocation6 + $0x340] sm:$0xff]
    %v1495 = vld [vmem:[#allocation6 + $0x348] sm:$0xff]
    %v1496 = vld [vmem:[#allocation6 + $0x350] sm:$0xff]
    %v1497 = vld [vmem:[#allocation6 + $0x358] sm:$0xff]
    %v1498 = vld [vmem:[#allocation6 + $0x360] sm:$0xff]
    %v1499 = vld [vmem:[#allocation6 + $0x368] sm:$0xff]
    %v1500 = vld [vmem:[#allocation6 + $0x370] sm:$0xff]
    %v1501 = vld [vmem:[#allocation6 + $0x378] sm:$0xff]
    %v1502 = vld [vmem:[#allocation6 + $0x380] sm:$0xff]
    %v1503 = vld [vmem:[#allocation6 + $0x388] sm:$0xff]
    %v1504 = vld [vmem:[#allocation6 + $0x390] sm:$0xff]
    %v1505 = vld [vmem:[#allocation6 + $0x398] sm:$0xff]
    %v1506 = vld [vmem:[#allocation6 + $0x3a0] sm:$0xff]
    %v1507 = vld [vmem:[#allocation6 + $0x3a8] sm:$0xff]
    %v1508 = vld [vmem:[#allocation6 + $0x3b0] sm:$0xff]
    %v1509 = vld [vmem:[#allocation6 + $0x3b8] sm:$0xff]
    %v1510 = vld [vmem:[#allocation6 + $0x3c0] sm:$0xff]
    %v1511 = vld [vmem:[#allocation6 + $0x3c8] sm:$0xff]
    %v1512 = vld [vmem:[#allocation6 + $0x3d0] sm:$0xff]
    %v1513 = vld [vmem:[#allocation6 + $0x3d8] sm:$0xff]
    %v1514 = vld [vmem:[#allocation6 + $0x3e0] sm:$0xff]
    %v1515 = vld [vmem:[#allocation6 + $0x3e8] sm:$0xff]
    %v1516 = vld [vmem:[#allocation6 + $0x3f0] sm:$0xff]
    %v1517 = vld [vmem:[#allocation6 + $0x3f8] sm:$0xff]
    %v1518 = vld [vmem:[%s6] sm:$0xf]
    %v1520 = vlaneseq
    %v1521 = vshrl.u32 %v1520, 7
    %v1522 = vsub.s32 0, %v1521
    %v1523 = vrot.slane %v1518, %v1522
    %v1524 = vlaneseq
    %v1525 = vshrl.u32 %v1524, 7
    %v1526 = vsub.s32 1, %v1525
    %v1527 = vrot.slane %v1518, %v1526
    %v1528 = vlaneseq
    %v1529 = vshrl.u32 %v1528, 7
    %v1530 = vsub.s32 2, %v1529
    %v1531 = vrot.slane %v1518, %v1530
    %v1532 = vlaneseq
    %v1533 = vshrl.u32 %v1532, 7
    %v1534 = vsub.s32 3, %v1533
    %v1535 = vrot.slane %v1518, %v1534
    %v1668 = vunpack.c.l.b16 %v1390
    %v1669 = vunpack.c.h.b16 %v1390
    %v1670 = vunpack.c.l.b16 %v1391
    %v1671 = vunpack.c.h.b16 %v1391
    %v1672 = vunpack.c.l.b16 %v1392
    %v1673 = vunpack.c.h.b16 %v1392
    %v1674 = vunpack.c.l.b16 %v1393
    %v1675 = vunpack.c.h.b16 %v1393
    %v1676 = vunpack.c.l.b16 %v1394
    %v1677 = vunpack.c.h.b16 %v1394
    %v1678 = vunpack.c.l.b16 %v1395
    %v1679 = vunpack.c.h.b16 %v1395
    %v1680 = vunpack.c.l.b16 %v1396
    %v1681 = vunpack.c.h.b16 %v1396
    %v1682 = vunpack.c.l.b16 %v1397
    %v1683 = vunpack.c.h.b16 %v1397
    %v1684 = vunpack.c.l.b16 %v1398
    %v1685 = vunpack.c.h.b16 %v1398
    %v1686 = vunpack.c.l.b16 %v1399
    %v1687 = vunpack.c.h.b16 %v1399
    %v1688 = vunpack.c.l.b16 %v1400
    %v1689 = vunpack.c.h.b16 %v1400
    %v1690 = vunpack.c.l.b16 %v1401
    %v1691 = vunpack.c.h.b16 %v1401
    %v1692 = vunpack.c.l.b16 %v1402
    %v1693 = vunpack.c.h.b16 %v1402
    %v1694 = vunpack.c.l.b16 %v1403
    %v1695 = vunpack.c.h.b16 %v1403
    %v1696 = vunpack.c.l.b16 %v1404
    %v1697 = vunpack.c.h.b16 %v1404
    %v1698 = vunpack.c.l.b16 %v1405
    %v1699 = vunpack.c.h.b16 %v1405
    %v1700 = vunpack.c.l.b16 %v1406
    %v1701 = vunpack.c.h.b16 %v1406
    %v1702 = vunpack.c.l.b16 %v1407
    %v1703 = vunpack.c.h.b16 %v1407
    %v1704 = vunpack.c.l.b16 %v1408
    %v1705 = vunpack.c.h.b16 %v1408
    %v1706 = vunpack.c.l.b16 %v1409
    %v1707 = vunpack.c.h.b16 %v1409
    %v1708 = vunpack.c.l.b16 %v1410
    %v1709 = vunpack.c.h.b16 %v1410
    %v1710 = vunpack.c.l.b16 %v1411
    %v1711 = vunpack.c.h.b16 %v1411
    %v1712 = vunpack.c.l.b16 %v1412
    %v1713 = vunpack.c.h.b16 %v1412
    %v1714 = vunpack.c.l.b16 %v1413
    %v1715 = vunpack.c.h.b16 %v1413
    %v1716 = vunpack.c.l.b16 %v1414
    %v1717 = vunpack.c.h.b16 %v1414
    %v1718 = vunpack.c.l.b16 %v1415
    %v1719 = vunpack.c.h.b16 %v1415
    %v1720 = vunpack.c.l.b16 %v1416
    %v1721 = vunpack.c.h.b16 %v1416
    %v1722 = vunpack.c.l.b16 %v1417
    %v1723 = vunpack.c.h.b16 %v1417
    %v1724 = vunpack.c.l.b16 %v1418
    %v1725 = vunpack.c.h.b16 %v1418
    %v1726 = vunpack.c.l.b16 %v1419
    %v1727 = vunpack.c.h.b16 %v1419
    %v1728 = vunpack.c.l.b16 %v1420
    %v1729 = vunpack.c.h.b16 %v1420
    %v1730 = vunpack.c.l.b16 %v1421
    %v1731 = vunpack.c.h.b16 %v1421
    %v1732 = vunpack.c.l.b16 %v1422
    %v1733 = vunpack.c.h.b16 %v1422
    %v1734 = vunpack.c.l.b16 %v1423
    %v1735 = vunpack.c.h.b16 %v1423
    %v1736 = vunpack.c.l.b16 %v1424
    %v1737 = vunpack.c.h.b16 %v1424
    %v1738 = vunpack.c.l.b16 %v1425
    %v1739 = vunpack.c.h.b16 %v1425
    %v1740 = vunpack.c.l.b16 %v1426
    %v1741 = vunpack.c.h.b16 %v1426
    %v1742 = vunpack.c.l.b16 %v1427
    %v1743 = vunpack.c.h.b16 %v1427
    %v1744 = vunpack.c.l.b16 %v1428
    %v1745 = vunpack.c.h.b16 %v1428
    %v1746 = vunpack.c.l.b16 %v1429
    %v1747 = vunpack.c.h.b16 %v1429
    %v1748 = vunpack.c.l.b16 %v1430
    %v1749 = vunpack.c.h.b16 %v1430
    %v1750 = vunpack.c.l.b16 %v1431
    %v1751 = vunpack.c.h.b16 %v1431
    %v1752 = vunpack.c.l.b16 %v1432
    %v1753 = vunpack.c.h.b16 %v1432
    %v1754 = vunpack.c.l.b16 %v1433
    %v1755 = vunpack.c.h.b16 %v1433
    %v1756 = vunpack.c.l.b16 %v1434
    %v1757 = vunpack.c.h.b16 %v1434
    %v1758 = vunpack.c.l.b16 %v1435
    %v1759 = vunpack.c.h.b16 %v1435
    %v1760 = vunpack.c.l.b16 %v1436
    %v1761 = vunpack.c.h.b16 %v1436
    %v1762 = vunpack.c.l.b16 %v1437
    %v1763 = vunpack.c.h.b16 %v1437
    %v1764 = vunpack.c.l.b16 %v1438
    %v1765 = vunpack.c.h.b16 %v1438
    %v1766 = vunpack.c.l.b16 %v1439
    %v1767 = vunpack.c.h.b16 %v1439
    %v1768 = vunpack.c.l.b16 %v1440
    %v1769 = vunpack.c.h.b16 %v1440
    %v1770 = vunpack.c.l.b16 %v1441
    %v1771 = vunpack.c.h.b16 %v1441
    %v1772 = vunpack.c.l.b16 %v1442
    %v1773 = vunpack.c.h.b16 %v1442
    %v1774 = vunpack.c.l.b16 %v1443
    %v1775 = vunpack.c.h.b16 %v1443
    %v1776 = vunpack.c.l.b16 %v1444
    %v1777 = vunpack.c.h.b16 %v1444
    %v1778 = vunpack.c.l.b16 %v1445
    %v1779 = vunpack.c.h.b16 %v1445
    %v1780 = vunpack.c.l.b16 %v1446
    %v1781 = vunpack.c.h.b16 %v1446
    %v1782 = vunpack.c.l.b16 %v1447
    %v1783 = vunpack.c.h.b16 %v1447
    %v1784 = vunpack.c.l.b16 %v1448
    %v1785 = vunpack.c.h.b16 %v1448
    %v1786 = vunpack.c.l.b16 %v1449
    %v1787 = vunpack.c.h.b16 %v1449
    %v1788 = vunpack.c.l.b16 %v1450
    %v1789 = vunpack.c.h.b16 %v1450
    %v1790 = vunpack.c.l.b16 %v1451
    %v1791 = vunpack.c.h.b16 %v1451
    %v1792 = vunpack.c.l.b16 %v1452
    %v1793 = vunpack.c.h.b16 %v1452
    %v1794 = vunpack.c.l.b16 %v1453
    %v1795 = vunpack.c.h.b16 %v1453
    %v1796 = vunpack.c.l.b16 %v1454
    %v1797 = vunpack.c.h.b16 %v1454
    %v1798 = vunpack.c.l.b16 %v1455
    %v1799 = vunpack.c.h.b16 %v1455
    %v1800 = vunpack.c.l.b16 %v1456
    %v1801 = vunpack.c.h.b16 %v1456
    %v1802 = vunpack.c.l.b16 %v1457
    %v1803 = vunpack.c.h.b16 %v1457
    %v1804 = vunpack.c.l.b16 %v1458
    %v1805 = vunpack.c.h.b16 %v1458
    %v1806 = vunpack.c.l.b16 %v1459
    %v1807 = vunpack.c.h.b16 %v1459
    %v1808 = vunpack.c.l.b16 %v1460
    %v1809 = vunpack.c.h.b16 %v1460
    %v1810 = vunpack.c.l.b16 %v1461
    %v1811 = vunpack.c.h.b16 %v1461
    %v1812 = vunpack.c.l.b16 %v1462
    %v1813 = vunpack.c.h.b16 %v1462
    %v1814 = vunpack.c.l.b16 %v1463
    %v1815 = vunpack.c.h.b16 %v1463
    %v1816 = vunpack.c.l.b16 %v1464
    %v1817 = vunpack.c.h.b16 %v1464
    %v1818 = vunpack.c.l.b16 %v1465
    %v1819 = vunpack.c.h.b16 %v1465
    %v1820 = vunpack.c.l.b16 %v1466
    %v1821 = vunpack.c.h.b16 %v1466
    %v1822 = vunpack.c.l.b16 %v1467
    %v1823 = vunpack.c.h.b16 %v1467
    %v1824 = vunpack.c.l.b16 %v1468
    %v1825 = vunpack.c.h.b16 %v1468
    %v1826 = vunpack.c.l.b16 %v1469
    %v1827 = vunpack.c.h.b16 %v1469
    %v1828 = vunpack.c.l.b16 %v1470
    %v1829 = vunpack.c.h.b16 %v1470
    %v1830 = vunpack.c.l.b16 %v1471
    %v1831 = vunpack.c.h.b16 %v1471
    %v1832 = vunpack.c.l.b16 %v1472
    %v1833 = vunpack.c.h.b16 %v1472
    %v1834 = vunpack.c.l.b16 %v1473
    %v1835 = vunpack.c.h.b16 %v1473
    %v1836 = vunpack.c.l.b16 %v1474
    %v1837 = vunpack.c.h.b16 %v1474
    %v1838 = vunpack.c.l.b16 %v1475
    %v1839 = vunpack.c.h.b16 %v1475
    %v1840 = vunpack.c.l.b16 %v1476
    %v1841 = vunpack.c.h.b16 %v1476
    %v1842 = vunpack.c.l.b16 %v1477
    %v1843 = vunpack.c.h.b16 %v1477
    %v1844 = vunpack.c.l.b16 %v1478
    %v1845 = vunpack.c.h.b16 %v1478
    %v1846 = vunpack.c.l.b16 %v1479
    %v1847 = vunpack.c.h.b16 %v1479
    %v1848 = vunpack.c.l.b16 %v1480
    %v1849 = vunpack.c.h.b16 %v1480
    %v1850 = vunpack.c.l.b16 %v1481
    %v1851 = vunpack.c.h.b16 %v1481
    %v1852 = vunpack.c.l.b16 %v1482
    %v1853 = vunpack.c.h.b16 %v1482
    %v1854 = vunpack.c.l.b16 %v1483
    %v1855 = vunpack.c.h.b16 %v1483
    %v1856 = vunpack.c.l.b16 %v1484
    %v1857 = vunpack.c.h.b16 %v1484
    %v1858 = vunpack.c.l.b16 %v1485
    %v1859 = vunpack.c.h.b16 %v1485
    %v1860 = vunpack.c.l.b16 %v1486
    %v1861 = vunpack.c.h.b16 %v1486
    %v1862 = vunpack.c.l.b16 %v1487
    %v1863 = vunpack.c.h.b16 %v1487
    %v1864 = vunpack.c.l.b16 %v1488
    %v1865 = vunpack.c.h.b16 %v1488
    %v1866 = vunpack.c.l.b16 %v1489
    %v1867 = vunpack.c.h.b16 %v1489
    %v1868 = vunpack.c.l.b16 %v1490
    %v1869 = vunpack.c.h.b16 %v1490
    %v1870 = vunpack.c.l.b16 %v1491
    %v1871 = vunpack.c.h.b16 %v1491
    %v1872 = vunpack.c.l.b16 %v1492
    %v1873 = vunpack.c.h.b16 %v1492
    %v1874 = vunpack.c.l.b16 %v1493
    %v1875 = vunpack.c.h.b16 %v1493
    %v1876 = vunpack.c.l.b16 %v1494
    %v1877 = vunpack.c.h.b16 %v1494
    %v1878 = vunpack.c.l.b16 %v1495
    %v1879 = vunpack.c.h.b16 %v1495
    %v1880 = vunpack.c.l.b16 %v1496
    %v1881 = vunpack.c.h.b16 %v1496
    %v1882 = vunpack.c.l.b16 %v1497
    %v1883 = vunpack.c.h.b16 %v1497
    %v1884 = vunpack.c.l.b16 %v1498
    %v1885 = vunpack.c.h.b16 %v1498
    %v1886 = vunpack.c.l.b16 %v1499
    %v1887 = vunpack.c.h.b16 %v1499
    %v1888 = vunpack.c.l.b16 %v1500
    %v1889 = vunpack.c.h.b16 %v1500
    %v1890 = vunpack.c.l.b16 %v1501
    %v1891 = vunpack.c.h.b16 %v1501
    %v1892 = vunpack.c.l.b16 %v1502
    %v1893 = vunpack.c.h.b16 %v1502
    %v1894 = vunpack.c.l.b16 %v1503
    %v1895 = vunpack.c.h.b16 %v1503
    %v1896 = vunpack.c.l.b16 %v1504
    %v1897 = vunpack.c.h.b16 %v1504
    %v1898 = vunpack.c.l.b16 %v1505
    %v1899 = vunpack.c.h.b16 %v1505
    %v1900 = vunpack.c.l.b16 %v1506
    %v1901 = vunpack.c.h.b16 %v1506
    %v1902 = vunpack.c.l.b16 %v1507
    %v1903 = vunpack.c.h.b16 %v1507
    %v1904 = vunpack.c.l.b16 %v1508
    %v1905 = vunpack.c.h.b16 %v1508
    %v1906 = vunpack.c.l.b16 %v1509
    %v1907 = vunpack.c.h.b16 %v1509
    %v1908 = vunpack.c.l.b16 %v1510
    %v1909 = vunpack.c.h.b16 %v1510
    %v1910 = vunpack.c.l.b16 %v1511
    %v1911 = vunpack.c.h.b16 %v1511
    %v1912 = vunpack.c.l.b16 %v1512
    %v1913 = vunpack.c.h.b16 %v1512
    %v1914 = vunpack.c.l.b16 %v1513
    %v1915 = vunpack.c.h.b16 %v1513
    %v1916 = vunpack.c.l.b16 %v1514
    %v1917 = vunpack.c.h.b16 %v1514
    %v1918 = vunpack.c.l.b16 %v1515
    %v1919 = vunpack.c.h.b16 %v1515
    %v1920 = vunpack.c.l.b16 %v1516
    %v1921 = vunpack.c.h.b16 %v1516
    %v1922 = vunpack.c.l.b16 %v1517
    %v1923 = vunpack.c.h.b16 %v1517
    %v1924 = vpack.c.b16 %v1672, %v1668
    %v1925 = vpack.c.b16 %v1673, %v1669
    %v1926 = vpack.c.b16 %v1674, %v1670
    %v1927 = vpack.c.b16 %v1675, %v1671
    %v1928 = vpack.c.b16 %v1680, %v1676
    %v1929 = vpack.c.b16 %v1681, %v1677
    %v1930 = vpack.c.b16 %v1682, %v1678
    %v1931 = vpack.c.b16 %v1683, %v1679
    %v1932 = vpack.c.b16 %v1688, %v1684
    %v1933 = vpack.c.b16 %v1689, %v1685
    %v1934 = vpack.c.b16 %v1690, %v1686
    %v1935 = vpack.c.b16 %v1691, %v1687
    %v1936 = vpack.c.b16 %v1696, %v1692
    %v1937 = vpack.c.b16 %v1697, %v1693
    %v1938 = vpack.c.b16 %v1698, %v1694
    %v1939 = vpack.c.b16 %v1699, %v1695
    %v1940 = vpack.c.b16 %v1704, %v1700
    %v1941 = vpack.c.b16 %v1705, %v1701
    %v1942 = vpack.c.b16 %v1706, %v1702
    %v1943 = vpack.c.b16 %v1707, %v1703
    %v1944 = vpack.c.b16 %v1712, %v1708
    %v1945 = vpack.c.b16 %v1713, %v1709
    %v1946 = vpack.c.b16 %v1714, %v1710
    %v1947 = vpack.c.b16 %v1715, %v1711
    %v1948 = vpack.c.b16 %v1720, %v1716
    %v1949 = vpack.c.b16 %v1721, %v1717
    %v1950 = vpack.c.b16 %v1722, %v1718
    %v1951 = vpack.c.b16 %v1723, %v1719
    %v1952 = vpack.c.b16 %v1728, %v1724
    %v1953 = vpack.c.b16 %v1729, %v1725
    %v1954 = vpack.c.b16 %v1730, %v1726
    %v1955 = vpack.c.b16 %v1731, %v1727
    %v1956 = vpack.c.b16 %v1736, %v1732
    %v1957 = vpack.c.b16 %v1737, %v1733
    %v1958 = vpack.c.b16 %v1738, %v1734
    %v1959 = vpack.c.b16 %v1739, %v1735
    %v1960 = vpack.c.b16 %v1744, %v1740
    %v1961 = vpack.c.b16 %v1745, %v1741
    %v1962 = vpack.c.b16 %v1746, %v1742
    %v1963 = vpack.c.b16 %v1747, %v1743
    %v1964 = vpack.c.b16 %v1752, %v1748
    %v1965 = vpack.c.b16 %v1753, %v1749
    %v1966 = vpack.c.b16 %v1754, %v1750
    %v1967 = vpack.c.b16 %v1755, %v1751
    %v1968 = vpack.c.b16 %v1760, %v1756
    %v1969 = vpack.c.b16 %v1761, %v1757
    %v1970 = vpack.c.b16 %v1762, %v1758
    %v1971 = vpack.c.b16 %v1763, %v1759
    %v1972 = vpack.c.b16 %v1768, %v1764
    %v1973 = vpack.c.b16 %v1769, %v1765
    %v1974 = vpack.c.b16 %v1770, %v1766
    %v1975 = vpack.c.b16 %v1771, %v1767
    %v1976 = vpack.c.b16 %v1776, %v1772
    %v1977 = vpack.c.b16 %v1777, %v1773
    %v1978 = vpack.c.b16 %v1778, %v1774
    %v1979 = vpack.c.b16 %v1779, %v1775
    %v1980 = vpack.c.b16 %v1784, %v1780
    %v1981 = vpack.c.b16 %v1785, %v1781
    %v1982 = vpack.c.b16 %v1786, %v1782
    %v1983 = vpack.c.b16 %v1787, %v1783
    %v1984 = vpack.c.b16 %v1792, %v1788
    %v1985 = vpack.c.b16 %v1793, %v1789
    %v1986 = vpack.c.b16 %v1794, %v1790
    %v1987 = vpack.c.b16 %v1795, %v1791
    %v1988 = vpack.c.b16 %v1800, %v1796
    %v1989 = vpack.c.b16 %v1801, %v1797
    %v1990 = vpack.c.b16 %v1802, %v1798
    %v1991 = vpack.c.b16 %v1803, %v1799
    %v1992 = vpack.c.b16 %v1808, %v1804
    %v1993 = vpack.c.b16 %v1809, %v1805
    %v1994 = vpack.c.b16 %v1810, %v1806
    %v1995 = vpack.c.b16 %v1811, %v1807
    %v1996 = vpack.c.b16 %v1816, %v1812
    %v1997 = vpack.c.b16 %v1817, %v1813
    %v1998 = vpack.c.b16 %v1818, %v1814
    %v1999 = vpack.c.b16 %v1819, %v1815
    %v2000 = vpack.c.b16 %v1824, %v1820
    %v2001 = vpack.c.b16 %v1825, %v1821
    %v2002 = vpack.c.b16 %v1826, %v1822
    %v2003 = vpack.c.b16 %v1827, %v1823
    %v2004 = vpack.c.b16 %v1832, %v1828
    %v2005 = vpack.c.b16 %v1833, %v1829
    %v2006 = vpack.c.b16 %v1834, %v1830
    %v2007 = vpack.c.b16 %v1835, %v1831
    %v2008 = vpack.c.b16 %v1840, %v1836
    %v2009 = vpack.c.b16 %v1841, %v1837
    %v2010 = vpack.c.b16 %v1842, %v1838
    %v2011 = vpack.c.b16 %v1843, %v1839
    %v2012 = vpack.c.b16 %v1848, %v1844
    %v2013 = vpack.c.b16 %v1849, %v1845
    %v2014 = vpack.c.b16 %v1850, %v1846
    %v2015 = vpack.c.b16 %v1851, %v1847
    %v2016 = vpack.c.b16 %v1856, %v1852
    %v2017 = vpack.c.b16 %v1857, %v1853
    %v2018 = vpack.c.b16 %v1858, %v1854
    %v2019 = vpack.c.b16 %v1859, %v1855
    %v2020 = vpack.c.b16 %v1864, %v1860
    %v2021 = vpack.c.b16 %v1865, %v1861
    %v2022 = vpack.c.b16 %v1866, %v1862
    %v2023 = vpack.c.b16 %v1867, %v1863
    %v2024 = vpack.c.b16 %v1872, %v1868
    %v2025 = vpack.c.b16 %v1873, %v1869
    %v2026 = vpack.c.b16 %v1874, %v1870
    %v2027 = vpack.c.b16 %v1875, %v1871
    %v2028 = vpack.c.b16 %v1880, %v1876
    %v2029 = vpack.c.b16 %v1881, %v1877
    %v2030 = vpack.c.b16 %v1882, %v1878
    %v2031 = vpack.c.b16 %v1883, %v1879
    %v2032 = vpack.c.b16 %v1888, %v1884
    %v2033 = vpack.c.b16 %v1889, %v1885
    %v2034 = vpack.c.b16 %v1890, %v1886
    %v2035 = vpack.c.b16 %v1891, %v1887
    %v2036 = vpack.c.b16 %v1896, %v1892
    %v2037 = vpack.c.b16 %v1897, %v1893
    %v2038 = vpack.c.b16 %v1898, %v1894
    %v2039 = vpack.c.b16 %v1899, %v1895
    %v2040 = vpack.c.b16 %v1904, %v1900
    %v2041 = vpack.c.b16 %v1905, %v1901
    %v2042 = vpack.c.b16 %v1906, %v1902
    %v2043 = vpack.c.b16 %v1907, %v1903
    %v2044 = vpack.c.b16 %v1912, %v1908
    %v2045 = vpack.c.b16 %v1913, %v1909
    %v2046 = vpack.c.b16 %v1914, %v1910
    %v2047 = vpack.c.b16 %v1915, %v1911
    %v2048 = vpack.c.b16 %v1920, %v1916
    %v2049 = vpack.c.b16 %v1921, %v1917
    %v2050 = vpack.c.b16 %v1922, %v1918
    %v2051 = vpack.c.b16 %v1923, %v1919
    %2180 = vmatprep.subr.bf16.mxu0 %v1953
    %2181 = vmatpush1.bf16.msra.mxu0 %v1952
    %2182 = vmatprep.subr.bf16.mxu0 %v1949
    %2183 = vmatpush1.bf16.msra.mxu0 %v1948
    %2184 = vmatprep.subr.bf16.mxu0 %v1945
    %2185 = vmatpush1.bf16.msra.mxu0 %v1944
    %2186 = vmatprep.subr.bf16.mxu0 %v1941
    %2187 = vmatpush1.bf16.msra.mxu0 %v1940
    %2188 = vmatprep.subr.bf16.mxu0 %v1937
    %2189 = vmatpush1.bf16.msra.mxu0 %v1936
    %2190 = vmatprep.subr.bf16.mxu0 %v1933
    %2191 = vmatpush1.bf16.msra.mxu0 %v1932
    %2192 = vmatprep.subr.bf16.mxu0 %v1929
    %2193 = vmatpush1.bf16.msra.mxu0 %v1928
    %2194 = vmatprep.subr.bf16.mxu0 %v1925
    %2195 = vmatpush1.bf16.msra.mxu0 %v1924
    %2196 = vmatprep.subr.bf16.mxu0 %v1985
    %2197 = vmatpush2.bf16.msra.mxu0 %v1984
    %2198 = vmatprep.subr.bf16.mxu0 %v1981
    %2199 = vmatpush2.bf16.msra.mxu0 %v1980
    %2200 = vmatprep.subr.bf16.mxu0 %v1977
    %2201 = vmatpush2.bf16.msra.mxu0 %v1976
    %2202 = vmatprep.subr.bf16.mxu0 %v1973
    %2203 = vmatpush2.bf16.msra.mxu0 %v1972
    %2204 = vmatprep.subr.bf16.mxu0 %v1969
    %2205 = vmatpush2.bf16.msra.mxu0 %v1968
    %2206 = vmatprep.subr.bf16.mxu0 %v1965
    %2207 = vmatpush2.bf16.msra.mxu0 %v1964
    %2208 = vmatprep.subr.bf16.mxu0 %v1961
    %2209 = vmatpush2.bf16.msra.mxu0 %v1960
    %2210 = vmatprep.subr.bf16.mxu0 %v1957
    %2211 = vmatpush2.bf16.msra.mxu0 %v1956
    %2212 = vmatprep.mubr.bf16.mxu0 %v1387
    %2213 = vmatmul.mubr.bf16.gmra.mxu0 %v1386
    %v2214 = vpop.f32.mrf.mxu0
    %v2215 = vadd.f32 %v1523, %v2214
    %v2216 = vpop.f32.mrf.mxu0
    %v2217 = vadd.f32 %v1527, %v2216
    %v2218 = vpop.f32.mrf.mxu0
    %v2219 = vpop.f32.mrf.mxu0
    %2220 = vdwg.mxu0
    %2221 = vmatprep.subr.bf16.mxu0 %v2017
    %2222 = vmatpush1.bf16.msra.mxu0 %v2016
    %2223 = vmatprep.subr.bf16.mxu0 %v2013
    %2224 = vmatpush1.bf16.msra.mxu0 %v2012
    %2225 = vmatprep.subr.bf16.mxu0 %v2009
    %2226 = vmatpush1.bf16.msra.mxu0 %v2008
    %2227 = vmatprep.subr.bf16.mxu0 %v2005
    %2228 = vmatpush1.bf16.msra.mxu0 %v2004
    %2229 = vmatprep.subr.bf16.mxu0 %v2001
    %2230 = vmatpush1.bf16.msra.mxu0 %v2000
    %2231 = vmatprep.subr.bf16.mxu0 %v1997
    %2232 = vmatpush1.bf16.msra.mxu0 %v1996
    %2233 = vmatprep.subr.bf16.mxu0 %v1993
    %2234 = vmatpush1.bf16.msra.mxu0 %v1992
    %2235 = vmatprep.subr.bf16.mxu0 %v1989
    %2236 = vmatpush1.bf16.msra.mxu0 %v1988
    %2237 = vmatprep.subr.bf16.mxu0 %v2049
    %2238 = vmatpush2.bf16.msra.mxu0 %v2048
    %2239 = vmatprep.subr.bf16.mxu0 %v2045
    %2240 = vmatpush2.bf16.msra.mxu0 %v2044
    %2241 = vmatprep.subr.bf16.mxu0 %v2041
    %2242 = vmatpush2.bf16.msra.mxu0 %v2040
    %2243 = vmatprep.subr.bf16.mxu0 %v2037
    %2244 = vmatpush2.bf16.msra.mxu0 %v2036
    %2245 = vmatprep.subr.bf16.mxu0 %v2033
    %2246 = vmatpush2.bf16.msra.mxu0 %v2032
    %2247 = vmatprep.subr.bf16.mxu0 %v2029
    %2248 = vmatpush2.bf16.msra.mxu0 %v2028
    %2249 = vmatprep.subr.bf16.mxu0 %v2025
    %2250 = vmatpush2.bf16.msra.mxu0 %v2024
    %2251 = vmatprep.subr.bf16.mxu0 %v2021
    %2252 = vmatpush2.bf16.msra.mxu0 %v2020
    %2253 = vmatprep.mubr.bf16.mxu0 %v1389
    %2254 = vmatmul.mubr.bf16.gmra.mxu0 %v1388
    %v2255 = vpop.f32.mrf.mxu0
    %v2256 = vadd.f32 %v2215, %v2255
    %v2257 = vpop.f32.mrf.mxu0
    %v2258 = vadd.f32 %v2217, %v2257
    %v2259 = vpop.f32.mrf.mxu0
    %v2260 = vpop.f32.mrf.mxu0
    %2261 = vdwg.mxu0
    %2262 = vmatprep.subr.bf16.mxu0 %v1955
    %2263 = vmatpush1.bf16.msra.mxu0 %v1954
    %2264 = vmatprep.subr.bf16.mxu0 %v1951
    %2265 = vmatpush1.bf16.msra.mxu0 %v1950
    %2266 = vmatprep.subr.bf16.mxu0 %v1947
    %2267 = vmatpush1.bf16.msra.mxu0 %v1946
    %2268 = vmatprep.subr.bf16.mxu0 %v1943
    %2269 = vmatpush1.bf16.msra.mxu0 %v1942
    %2270 = vmatprep.subr.bf16.mxu0 %v1939
    %2271 = vmatpush1.bf16.msra.mxu0 %v1938
    %2272 = vmatprep.subr.bf16.mxu0 %v1935
    %2273 = vmatpush1.bf16.msra.mxu0 %v1934
    %2274 = vmatprep.subr.bf16.mxu0 %v1931
    %2275 = vmatpush1.bf16.msra.mxu0 %v1930
    %2276 = vmatprep.subr.bf16.mxu0 %v1927
    %2277 = vmatpush1.bf16.msra.mxu0 %v1926
    %2278 = vmatprep.subr.bf16.mxu0 %v1987
    %2279 = vmatpush2.bf16.msra.mxu0 %v1986
    %2280 = vmatprep.subr.bf16.mxu0 %v1983
    %2281 = vmatpush2.bf16.msra.mxu0 %v1982
    %2282 = vmatprep.subr.bf16.mxu0 %v1979
    %2283 = vmatpush2.bf16.msra.mxu0 %v1978
    %2284 = vmatprep.subr.bf16.mxu0 %v1975
    %2285 = vmatpush2.bf16.msra.mxu0 %v1974
    %2286 = vmatprep.subr.bf16.mxu0 %v1971
    %2287 = vmatpush2.bf16.msra.mxu0 %v1970
    %2288 = vmatprep.subr.bf16.mxu0 %v1967
    %2289 = vmatpush2.bf16.msra.mxu0 %v1966
    %2290 = vmatprep.subr.bf16.mxu0 %v1963
    %2291 = vmatpush2.bf16.msra.mxu0 %v1962
    %2292 = vmatprep.subr.bf16.mxu0 %v1959
    %2293 = vmatpush2.bf16.msra.mxu0 %v1958
    %2294 = vmatprep.mubr.bf16.mxu0 %v1387
    %2295 = vmatmul.mubr.bf16.gmra.mxu0 %v1386
    %v2296 = vpop.f32.mrf.mxu0
    %v2297 = vadd.f32 %v1531, %v2296
    %v2298 = vpop.f32.mrf.mxu0
    %v2299 = vadd.f32 %v1535, %v2298
    %v2300 = vpop.f32.mrf.mxu0
    %v2301 = vpop.f32.mrf.mxu0
    %2302 = vdwg.mxu0
    %2303 = vmatprep.subr.bf16.mxu0 %v2019
    %2304 = vmatpush1.bf16.msra.mxu0 %v2018
    %2305 = vmatprep.subr.bf16.mxu0 %v2015
    %2306 = vmatpush1.bf16.msra.mxu0 %v2014
    %2307 = vmatprep.subr.bf16.mxu0 %v2011
    %2308 = vmatpush1.bf16.msra.mxu0 %v2010
    %2309 = vmatprep.subr.bf16.mxu0 %v2007
    %2310 = vmatpush1.bf16.msra.mxu0 %v2006
    %2311 = vmatprep.subr.bf16.mxu0 %v2003
    %2312 = vmatpush1.bf16.msra.mxu0 %v2002
    %2313 = vmatprep.subr.bf16.mxu0 %v1999
    %2314 = vmatpush1.bf16.msra.mxu0 %v1998
    %2315 = vmatprep.subr.bf16.mxu0 %v1995
    %2316 = vmatpush1.bf16.msra.mxu0 %v1994
    %2317 = vmatprep.subr.bf16.mxu0 %v1991
    %2318 = vmatpush1.bf16.msra.mxu0 %v1990
    %2319 = vmatprep.subr.bf16.mxu0 %v2051
    %2320 = vmatpush2.bf16.msra.mxu0 %v2050
    %2321 = vmatprep.subr.bf16.mxu0 %v2047
    %2322 = vmatpush2.bf16.msra.mxu0 %v2046
    %2323 = vmatprep.subr.bf16.mxu0 %v2043
    %2324 = vmatpush2.bf16.msra.mxu0 %v2042
    %2325 = vmatprep.subr.bf16.mxu0 %v2039
    %2326 = vmatpush2.bf16.msra.mxu0 %v2038
    %2327 = vmatprep.subr.bf16.mxu0 %v2035
    %2328 = vmatpush2.bf16.msra.mxu0 %v2034
    %2329 = vmatprep.subr.bf16.mxu0 %v2031
    %2330 = vmatpush2.bf16.msra.mxu0 %v2030
    %2331 = vmatprep.subr.bf16.mxu0 %v2027
    %2332 = vmatpush2.bf16.msra.mxu0 %v2026
    %2333 = vmatprep.subr.bf16.mxu0 %v2023
    %2334 = vmatpush2.bf16.msra.mxu0 %v2022
    %2335 = vmatprep.mubr.bf16.mxu0 %v1389
    %2336 = vmatmul.mubr.bf16.gmra.mxu0 %v1388
    %v2337 = vpop.f32.mrf.mxu0
    %v2338 = vadd.f32 %v2297, %v2337
    %v2339 = vpop.f32.mrf.mxu0
    %v2340 = vadd.f32 %v2299, %v2339
    %v2341 = vpop.f32.mrf.mxu0
    %v2342 = vpop.f32.mrf.mxu0
    %2343 = vdwg.mxu0
    %v2344 = vmax.f32 %v2256, 0.0
    %v2345 = vmax.f32 %v2258, 0.0
    %v2346 = vmax.f32 %v2338, 0.0
    %v2347 = vmax.f32 %v2340, 0.0
    %v2348 = vpack.c.bf16 %v2344, %v2344
    %v2349 = vpack.c.bf16 %v2345, %v2345
    %v2350 = vpack.c.bf16 %v2346, %v2346
    %v2351 = vpack.c.bf16 %v2347, %v2347
    %v2352 = vld [vmem:[#allocation7] sm:$0xf]
    %v2353 = vld [vmem:[#allocation7 + $0x4] sm:$0xf]
    %v2354 = vld [vmem:[#allocation7 + $0x8] sm:$0xf]
    %v2355 = vld [vmem:[#allocation7 + $0xc] sm:$0xf]
    %v2356 = vld [vmem:[#allocation7 + $0x10] sm:$0xf]
    %v2357 = vld [vmem:[#allocation7 + $0x14] sm:$0xf]
    %v2358 = vld [vmem:[#allocation7 + $0x18] sm:$0xf]
    %v2359 = vld [vmem:[#allocation7 + $0x1c] sm:$0xf]
    %v2360 = vld [vmem:[#allocation7 + $0x20] sm:$0xf]
    %v2361 = vld [vmem:[#allocation7 + $0x24] sm:$0xf]
    %v2362 = vld [vmem:[#allocation7 + $0x28] sm:$0xf]
    %v2363 = vld [vmem:[#allocation7 + $0x2c] sm:$0xf]
    %v2364 = vld [vmem:[#allocation7 + $0x30] sm:$0xf]
    %v2365 = vld [vmem:[#allocation7 + $0x34] sm:$0xf]
    %v2366 = vld [vmem:[#allocation7 + $0x38] sm:$0xf]
    %v2367 = vld [vmem:[#allocation7 + $0x3c] sm:$0xf]
    %v2368 = vld [vmem:[#allocation7 + $0x40] sm:$0xf]
    %v2369 = vld [vmem:[#allocation7 + $0x44] sm:$0xf]
    %v2370 = vld [vmem:[#allocation7 + $0x48] sm:$0xf]
    %v2371 = vld [vmem:[#allocation7 + $0x4c] sm:$0xf]
    %v2372 = vld [vmem:[#allocation7 + $0x50] sm:$0xf]
    %v2373 = vld [vmem:[#allocation7 + $0x54] sm:$0xf]
    %v2374 = vld [vmem:[#allocation7 + $0x58] sm:$0xf]
    %v2375 = vld [vmem:[#allocation7 + $0x5c] sm:$0xf]
    %v2376 = vld [vmem:[#allocation7 + $0x60] sm:$0xf]
    %v2377 = vld [vmem:[#allocation7 + $0x64] sm:$0xf]
    %v2378 = vld [vmem:[#allocation7 + $0x68] sm:$0xf]
    %v2379 = vld [vmem:[#allocation7 + $0x6c] sm:$0xf]
    %v2380 = vld [vmem:[#allocation7 + $0x70] sm:$0xf]
    %v2381 = vld [vmem:[#allocation7 + $0x74] sm:$0xf]
    %v2382 = vld [vmem:[#allocation7 + $0x78] sm:$0xf]
    %v2383 = vld [vmem:[#allocation7 + $0x7c] sm:$0xf]
    %v2384 = vld [vmem:[#allocation7 + $0x80] sm:$0xf]
    %v2385 = vld [vmem:[#allocation7 + $0x84] sm:$0xf]
    %v2386 = vld [vmem:[#allocation7 + $0x88] sm:$0xf]
    %v2387 = vld [vmem:[#allocation7 + $0x8c] sm:$0xf]
    %v2388 = vld [vmem:[#allocation7 + $0x90] sm:$0xf]
    %v2389 = vld [vmem:[#allocation7 + $0x94] sm:$0xf]
    %v2390 = vld [vmem:[#allocation7 + $0x98] sm:$0xf]
    %v2391 = vld [vmem:[#allocation7 + $0x9c] sm:$0xf]
    %v2392 = vld [vmem:[#allocation7 + $0xa0] sm:$0xf]
    %v2393 = vld [vmem:[#allocation7 + $0xa4] sm:$0xf]
    %v2394 = vld [vmem:[#allocation7 + $0xa8] sm:$0xf]
    %v2395 = vld [vmem:[#allocation7 + $0xac] sm:$0xf]
    %v2396 = vld [vmem:[#allocation7 + $0xb0] sm:$0xf]
    %v2397 = vld [vmem:[#allocation7 + $0xb4] sm:$0xf]
    %v2398 = vld [vmem:[#allocation7 + $0xb8] sm:$0xf]
    %v2399 = vld [vmem:[#allocation7 + $0xbc] sm:$0xf]
    %v2400 = vld [vmem:[#allocation7 + $0xc0] sm:$0xf]
    %v2401 = vld [vmem:[#allocation7 + $0xc4] sm:$0xf]
    %v2402 = vld [vmem:[#allocation7 + $0xc8] sm:$0xf]
    %v2403 = vld [vmem:[#allocation7 + $0xcc] sm:$0xf]
    %v2404 = vld [vmem:[#allocation7 + $0xd0] sm:$0xf]
    %v2405 = vld [vmem:[#allocation7 + $0xd4] sm:$0xf]
    %v2406 = vld [vmem:[#allocation7 + $0xd8] sm:$0xf]
    %v2407 = vld [vmem:[#allocation7 + $0xdc] sm:$0xf]
    %v2408 = vld [vmem:[#allocation7 + $0xe0] sm:$0xf]
    %v2409 = vld [vmem:[#allocation7 + $0xe4] sm:$0xf]
    %v2410 = vld [vmem:[#allocation7 + $0xe8] sm:$0xf]
    %v2411 = vld [vmem:[#allocation7 + $0xec] sm:$0xf]
    %v2412 = vld [vmem:[#allocation7 + $0xf0] sm:$0xf]
    %v2413 = vld [vmem:[#allocation7 + $0xf4] sm:$0xf]
    %v2414 = vld [vmem:[#allocation7 + $0xf8] sm:$0xf]
    %v2415 = vld [vmem:[#allocation7 + $0xfc] sm:$0xf]
    %v2416 = vld [vmem:[%s8] sm:$0x1]
    %v2418 = vlaneseq
    %v2419 = vshrl.u32 %v2418, 7
    %v2420 = vsub.s32 0, %v2419
    %v2421 = vrot.slane %v2416, %v2420
    %v2487 = vunpack.c.l.b16 %v2352
    %v2488 = vunpack.c.l.b16 %v2353
    %v2489 = vunpack.c.l.b16 %v2354
    %v2490 = vunpack.c.l.b16 %v2355
    %v2491 = vunpack.c.l.b16 %v2356
    %v2492 = vunpack.c.l.b16 %v2357
    %v2493 = vunpack.c.l.b16 %v2358
    %v2494 = vunpack.c.l.b16 %v2359
    %v2495 = vunpack.c.l.b16 %v2360
    %v2496 = vunpack.c.l.b16 %v2361
    %v2497 = vunpack.c.l.b16 %v2362
    %v2498 = vunpack.c.l.b16 %v2363
    %v2499 = vunpack.c.l.b16 %v2364
    %v2500 = vunpack.c.l.b16 %v2365
    %v2501 = vunpack.c.l.b16 %v2366
    %v2502 = vunpack.c.l.b16 %v2367
    %v2503 = vunpack.c.l.b16 %v2368
    %v2504 = vunpack.c.l.b16 %v2369
    %v2505 = vunpack.c.l.b16 %v2370
    %v2506 = vunpack.c.l.b16 %v2371
    %v2507 = vunpack.c.l.b16 %v2372
    %v2508 = vunpack.c.l.b16 %v2373
    %v2509 = vunpack.c.l.b16 %v2374
    %v2510 = vunpack.c.l.b16 %v2375
    %v2511 = vunpack.c.l.b16 %v2376
    %v2512 = vunpack.c.l.b16 %v2377
    %v2513 = vunpack.c.l.b16 %v2378
    %v2514 = vunpack.c.l.b16 %v2379
    %v2515 = vunpack.c.l.b16 %v2380
    %v2516 = vunpack.c.l.b16 %v2381
    %v2517 = vunpack.c.l.b16 %v2382
    %v2518 = vunpack.c.l.b16 %v2383
    %v2519 = vunpack.c.l.b16 %v2384
    %v2520 = vunpack.c.l.b16 %v2385
    %v2521 = vunpack.c.l.b16 %v2386
    %v2522 = vunpack.c.l.b16 %v2387
    %v2523 = vunpack.c.l.b16 %v2388
    %v2524 = vunpack.c.l.b16 %v2389
    %v2525 = vunpack.c.l.b16 %v2390
    %v2526 = vunpack.c.l.b16 %v2391
    %v2527 = vunpack.c.l.b16 %v2392
    %v2528 = vunpack.c.l.b16 %v2393
    %v2529 = vunpack.c.l.b16 %v2394
    %v2530 = vunpack.c.l.b16 %v2395
    %v2531 = vunpack.c.l.b16 %v2396
    %v2532 = vunpack.c.l.b16 %v2397
    %v2533 = vunpack.c.l.b16 %v2398
    %v2534 = vunpack.c.l.b16 %v2399
    %v2535 = vunpack.c.l.b16 %v2400
    %v2536 = vunpack.c.l.b16 %v2401
    %v2537 = vunpack.c.l.b16 %v2402
    %v2538 = vunpack.c.l.b16 %v2403
    %v2539 = vunpack.c.l.b16 %v2404
    %v2540 = vunpack.c.l.b16 %v2405
    %v2541 = vunpack.c.l.b16 %v2406
    %v2542 = vunpack.c.l.b16 %v2407
    %v2543 = vunpack.c.l.b16 %v2408
    %v2544 = vunpack.c.l.b16 %v2409
    %v2545 = vunpack.c.l.b16 %v2410
    %v2546 = vunpack.c.l.b16 %v2411
    %v2547 = vunpack.c.l.b16 %v2412
    %v2548 = vunpack.c.l.b16 %v2413
    %v2549 = vunpack.c.l.b16 %v2414
    %v2550 = vunpack.c.l.b16 %v2415
    %v2551 = vpack.c.b16 %v2488, %v2487
    %v2552 = vpack.c.b16 %v2490, %v2489
    %v2553 = vpack.c.b16 %v2492, %v2491
    %v2554 = vpack.c.b16 %v2494, %v2493
    %v2555 = vpack.c.b16 %v2496, %v2495
    %v2556 = vpack.c.b16 %v2498, %v2497
    %v2557 = vpack.c.b16 %v2500, %v2499
    %v2558 = vpack.c.b16 %v2502, %v2501
    %v2559 = vpack.c.b16 %v2504, %v2503
    %v2560 = vpack.c.b16 %v2506, %v2505
    %v2561 = vpack.c.b16 %v2508, %v2507
    %v2562 = vpack.c.b16 %v2510, %v2509
    %v2563 = vpack.c.b16 %v2512, %v2511
    %v2564 = vpack.c.b16 %v2514, %v2513
    %v2565 = vpack.c.b16 %v2516, %v2515
    %v2566 = vpack.c.b16 %v2518, %v2517
    %v2567 = vpack.c.b16 %v2520, %v2519
    %v2568 = vpack.c.b16 %v2522, %v2521
    %v2569 = vpack.c.b16 %v2524, %v2523
    %v2570 = vpack.c.b16 %v2526, %v2525
    %v2571 = vpack.c.b16 %v2528, %v2527
    %v2572 = vpack.c.b16 %v2530, %v2529
    %v2573 = vpack.c.b16 %v2532, %v2531
    %v2574 = vpack.c.b16 %v2534, %v2533
    %v2575 = vpack.c.b16 %v2536, %v2535
    %v2576 = vpack.c.b16 %v2538, %v2537
    %v2577 = vpack.c.b16 %v2540, %v2539
    %v2578 = vpack.c.b16 %v2542, %v2541
    %v2579 = vpack.c.b16 %v2544, %v2543
    %v2580 = vpack.c.b16 %v2546, %v2545
    %v2581 = vpack.c.b16 %v2548, %v2547
    %v2582 = vpack.c.b16 %v2550, %v2549
    %2615 = vmatprep.subr.bf16.mxu0 0
    %2616 = vmatpush1.bf16.msra.mxu0 %v2558
    %2617 = vmatprep.subr.bf16.mxu0 0
    %2618 = vmatpush1.bf16.msra.mxu0 %v2557
    %2619 = vmatprep.subr.bf16.mxu0 0
    %2620 = vmatpush1.bf16.msra.mxu0 %v2556
    %2621 = vmatprep.subr.bf16.mxu0 0
    %2622 = vmatpush1.bf16.msra.mxu0 %v2555
    %2623 = vmatprep.subr.bf16.mxu0 0
    %2624 = vmatpush1.bf16.msra.mxu0 %v2554
    %2625 = vmatprep.subr.bf16.mxu0 0
    %2626 = vmatpush1.bf16.msra.mxu0 %v2553
    %2627 = vmatprep.subr.bf16.mxu0 0
    %2628 = vmatpush1.bf16.msra.mxu0 %v2552
    %2629 = vmatprep.subr.bf16.mxu0 0
    %2630 = vmatpush1.bf16.msra.mxu0 %v2551
    %2631 = vmatprep.subr.bf16.mxu0 0
    %2632 = vmatpush2.bf16.msra.mxu0 %v2566
    %2633 = vmatprep.subr.bf16.mxu0 0
    %2634 = vmatpush2.bf16.msra.mxu0 %v2565
    %2635 = vmatprep.subr.bf16.mxu0 0
    %2636 = vmatpush2.bf16.msra.mxu0 %v2564
    %2637 = vmatprep.subr.bf16.mxu0 0
    %2638 = vmatpush2.bf16.msra.mxu0 %v2563
    %2639 = vmatprep.subr.bf16.mxu0 0
    %2640 = vmatpush2.bf16.msra.mxu0 %v2562
    %2641 = vmatprep.subr.bf16.mxu0 0
    %2642 = vmatpush2.bf16.msra.mxu0 %v2561
    %2643 = vmatprep.subr.bf16.mxu0 0
    %2644 = vmatpush2.bf16.msra.mxu0 %v2560
    %2645 = vmatprep.subr.bf16.mxu0 0
    %2646 = vmatpush2.bf16.msra.mxu0 %v2559
    %2647 = vmatprep.mubr.bf16.mxu0 %v2349
    %2648 = vmatmul.mubr.bf16.gmra.mxu0 %v2348
    %v2649 = vpop.f32.mrf.mxu0
    %v2650 = vadd.f32 %v2421, %v2649
    %v2651 = vpop.f32.mrf.mxu0
    %v2652 = vpop.f32.mrf.mxu0
    %v2653 = vpop.f32.mrf.mxu0
    %2654 = vdwg.mxu0
    %2655 = vmatprep.subr.bf16.mxu0 0
    %2656 = vmatpush1.bf16.msra.mxu0 %v2574
    %2657 = vmatprep.subr.bf16.mxu0 0
    %2658 = vmatpush1.bf16.msra.mxu0 %v2573
    %2659 = vmatprep.subr.bf16.mxu0 0
    %2660 = vmatpush1.bf16.msra.mxu0 %v2572
    %2661 = vmatprep.subr.bf16.mxu0 0
    %2662 = vmatpush1.bf16.msra.mxu0 %v2571
    %2663 = vmatprep.subr.bf16.mxu0 0
    %2664 = vmatpush1.bf16.msra.mxu0 %v2570
    %2665 = vmatprep.subr.bf16.mxu0 0
    %2666 = vmatpush1.bf16.msra.mxu0 %v2569
    %2667 = vmatprep.subr.bf16.mxu0 0
    %2668 = vmatpush1.bf16.msra.mxu0 %v2568
    %2669 = vmatprep.subr.bf16.mxu0 0
    %2670 = vmatpush1.bf16.msra.mxu0 %v2567
    %2671 = vmatprep.subr.bf16.mxu0 0
    %2672 = vmatpush2.bf16.msra.mxu0 %v2582
    %2673 = vmatprep.subr.bf16.mxu0 0
    %2674 = vmatpush2.bf16.msra.mxu0 %v2581
    %2675 = vmatprep.subr.bf16.mxu0 0
    %2676 = vmatpush2.bf16.msra.mxu0 %v2580
    %2677 = vmatprep.subr.bf16.mxu0 0
    %2678 = vmatpush2.bf16.msra.mxu0 %v2579
    %2679 = vmatprep.subr.bf16.mxu0 0
    %2680 = vmatpush2.bf16.msra.mxu0 %v2578
    %2681 = vmatprep.subr.bf16.mxu0 0
    %2682 = vmatpush2.bf16.msra.mxu0 %v2577
    %2683 = vmatprep.subr.bf16.mxu0 0
    %2684 = vmatpush2.bf16.msra.mxu0 %v2576
    %2685 = vmatprep.subr.bf16.mxu0 0
    %2686 = vmatpush2.bf16.msra.mxu0 %v2575
    %2687 = vmatprep.mubr.bf16.mxu0 %v2351
    %2688 = vmatmul.mubr.bf16.gmra.mxu0 %v2350
    %v2689 = vpop.f32.mrf.mxu0
    %v2690 = vadd.f32 %v2650, %v2689
    %v2691 = vpop.f32.mrf.mxu0
    %v2692 = vpop.f32.mrf.mxu0
    %v2693 = vpop.f32.mrf.mxu0
    %2694 = vdwg.mxu0
    %v2695 = vtanh.pop %v2690
    %v2696 = vpack.c.bf16 %v2695, %v2695
    %2697 = vst [vmem:[%s9] sm:$0xf] %v2696
    // Predicated region
    $region54: #{pytorch_mlp_forward.1} parent=1 // pred_check
      _
    $region55: #{pytorch_mlp_forward.1} parent=1 // pred_check_branch
      %2699 = sbr.rel (0) target = $region57
    $region56: #{pytorch_mlp_forward.1} parent=1 // pred_region
      _
    $region57: #{pytorch_mlp_forward.1} parent=1 // pred_fallthru
      _
    // Predicated region
    $region58: #{pytorch_mlp_forward.1} parent=1 // pred_check
      _
    $region59: #{pytorch_mlp_forward.1} parent=1 // pred_check_branch
      %2701 = sbr.rel (0) target = $region61
    $region60: #{pytorch_mlp_forward.1} parent=1 // pred_region
      _
    $region61: #{pytorch_mlp_forward.1} parent=1 // pred_fallthru
      _
    %2702 = vsyncpa [#allocation3], 1
    %2703 = vsyncpa [#allocation5], 1
    %2704 = vsyncpa [#allocation8], 1

</llo_original>
